<compile_context>
chip_gen: v7x
topology: tpu7x:2x2x1
jax: 0.10.0
libtpu: 0.0.40
codegen_flags: <defaults>
</compile_context>

<pallas_src>
import jax
import jax.numpy as jnp
from jax.experimental import pallas as pl
from jax.experimental.pallas import tpu as pltpu

BN_EPS = 1e-5


def _band_weights(w_hwio, W):
    """(3,3,Cin,Cout) HWIO conv weights -> (3, W*Cin, W*Cout) block-banded.

    A[dy][w_in*C + c_in, w_out*C + c_out] = w[dy, w_in - w_out + 1, c_in, c_out]
    (zero outside the band), so `row @ A[dy]` applies all three dx taps of a
    3x3 conv including the zero padding at the W boundary.
    """
    w = w_hwio.astype(jnp.float32)
    mats = []
    for dy in range(3):
        A = None
        for dx in range(3):
            shift = jnp.eye(W, k=1 - dx, dtype=jnp.float32)   # (w_in, w_out)
            blk = jnp.kron(shift, w[dy, dx])
            A = blk if A is None else A + blk
        mats.append(A)
    return jnp.stack(mats, axis=0)


def _make_fused_kernel(N, H, W, C):
    WC = W * C
    M = N * H
    inv_count = 1.0 / float(N * H * W)

    def conv3x3(pad_ref, a_ref):
        # pad_ref: (N, H+2, WC) with zero border rows; a_ref: (3, WC, WC)
        acc = jnp.zeros((M, WC), jnp.float32)
        for dy in range(3):
            rows = pad_ref[:, dy:dy + H, :].reshape(M, WC)
            acc = acc + jnp.dot(rows, a_ref[dy],
                                preferred_element_type=jnp.float32)
        return acc

    def bn_relu(acc, p, gamma, beta, residual=None):
        # Batch statistics over (N, H, W) per channel, in lane-dense layout.
        s = jnp.sum(acc, axis=0, keepdims=True)                      # (1, WC)
        mean = jnp.dot(s, p, preferred_element_type=jnp.float32) * inv_count
        d = acc - mean
        s2 = jnp.sum(d * d, axis=0, keepdims=True)
        var = jnp.dot(s2, p, preferred_element_type=jnp.float32) * inv_count
        scale = gamma * jax.lax.rsqrt(var + BN_EPS)                  # (1, WC)
        y = d * scale + beta
        if residual is not None:
            y = y + residual
        return jnp.maximum(y, 0.0)

    def kernel(x_ref, a1_ref, a2_ref, bn_ref, p_ref, o_ref, pad_ref):
        p = p_ref[...]                                               # (WC, WC)

        # ---- stage 1: in-kernel H padding, conv1, bn1, relu --------------
        pad_ref[...] = jnp.zeros_like(pad_ref)
        pad_ref[:, 1:H + 1, :] = x_ref[...]
        y1 = bn_relu(conv3x3(pad_ref, a1_ref), p,
                     bn_ref[0:1, :], bn_ref[1:2, :])

        # ---- stage 2: reuse scratch (border rows are still zero) ---------
        pad_ref[:, 1:H + 1, :] = y1.reshape(N, H, WC)
        y2 = bn_relu(conv3x3(pad_ref, a2_ref), p,
                     bn_ref[2:3, :], bn_ref[3:4, :],
                     residual=x_ref[...].reshape(M, WC))
        o_ref[...] = y2

    return kernel


def basic_block1(x_nchw, params):
    """Forward pass of BasicBlock1. x_nchw: (N, C, H, W) float32."""
    N, C, H, W = x_nchw.shape
    WC = W * C

    # NCHW -> NHWC -> (N, H, W*C); lane axis is (w, c) with c fastest.
    x = jnp.transpose(x_nchw, (0, 2, 3, 1)).astype(jnp.float32).reshape(N, H, WC)

    a1 = _band_weights(params["w1"], W)                 # (3, WC, WC)
    a2 = _band_weights(params["w2"], W)

    # gamma/beta replicated onto the (w, c) lane axis, packed in one ref.
    bn = jnp.stack([
        jnp.tile(params["g1"].astype(jnp.float32), W),
        jnp.tile(params["b1"].astype(jnp.float32), W),
        jnp.tile(params["g2"].astype(jnp.float32), W),
        jnp.tile(params["b2"].astype(jnp.float32), W),
    ])                                                  # (4, WC)

    # Channel-sum / replicate matrix: (s @ P)[w*C + c] = sum_w' s[w'*C + c].
    p = jnp.kron(jnp.ones((W, W), jnp.float32), jnp.eye(C, dtype=jnp.float32))

    vmem = pl.BlockSpec(memory_space=pltpu.MemorySpace.VMEM)
    out = pl.pallas_call(
        _make_fused_kernel(N, H, W, C),
        out_shape=jax.ShapeDtypeStruct((N * H, WC), jnp.float32),
        in_specs=[vmem, vmem, vmem, vmem, vmem],
        out_specs=vmem,
        scratch_shapes=[pltpu.VMEM((N, H + 2, WC), jnp.float32)],
    )(x, a1, a2, bn, p)

    out = out.reshape(N, H, W, C)
    return jnp.transpose(out, (0, 3, 1, 2))             # back to NCHW


def reference_block(x_nchw, params):
    """Pure-JAX reference (lax conv) for correctness check."""
    C = x_nchw.shape[1]
    x = jnp.transpose(x_nchw, (0, 2, 3, 1)).astype(jnp.float32)

    def conv(x, w):
        return jax.lax.conv_general_dilated(
            x, w, (1, 1), "SAME",
            dimension_numbers=("NHWC", "HWIO", "NHWC"))

    def bn(y, g, b):
        mean = jnp.mean(y, axis=(0, 1, 2), keepdims=True)
        var = jnp.mean((y - mean) ** 2, axis=(0, 1, 2), keepdims=True)
        return g.reshape(1, 1, 1, C) * (y - mean) * jax.lax.rsqrt(var + BN_EPS) \
            + b.reshape(1, 1, 1, C)

    y = jnp.maximum(bn(conv(x, params["w1"]), params["g1"], params["b1"]), 0.0)
    y = bn(conv(y, params["w2"]), params["g2"], params["b2"]) + x
    y = jnp.maximum(y, 0.0)
    return jnp.transpose(y, (0, 3, 1, 2))


if __name__ == "__main__":
    # Small shapes consistent with the module: in_channel=8, 16x16 spatial,
    # so W * C = 128 = one full lane row.
    N, C, H, W = 2, 8, 16, 16

    key = jax.random.PRNGKey(0)
    kx, kw1, kw2 = jax.random.split(key, 3)

    x = jax.random.normal(kx, (N, C, H, W), dtype=jnp.float32)

    # Deterministic parameter init (conv weights in HWIO; BN as nn.BatchNorm2d).
    fan_in = C * 3 * 3
    params = {
        "w1": jax.random.normal(kw1, (3, 3, C, C), dtype=jnp.float32)
              * (2.0 / fan_in) ** 0.5,
        "w2": jax.random.normal(kw2, (3, 3, C, C), dtype=jnp.float32)
              * (2.0 / fan_in) ** 0.5,
        "g1": jnp.ones((C,), jnp.float32),
        "b1": jnp.zeros((C,), jnp.float32),
        "g2": jnp.ones((C,), jnp.float32),
        "b2": jnp.zeros((C,), jnp.float32),
    }

    fwd = jax.jit(basic_block1)
    out = jax.block_until_ready(fwd(x, params))
    ref = jax.block_until_ready(reference_block(x, params))

    assert out.shape == (N, C, H, W)
    assert jnp.allclose(out, ref, rtol=1e-3, atol=1e-3), "mismatch vs reference"
    print("KERNEL_OK")
</pallas_src>

<mosaic_0001>
module attributes {stable_mosaic.version = 11 : i64} {
  func.func @kernel(%arg0: memref<2x16x128xf32, #tpu.memory_space<vmem>>, %arg1: memref<3x128x128xf32, #tpu.memory_space<vmem>>, %arg2: memref<3x128x128xf32, #tpu.memory_space<vmem>>, %arg3: memref<4x128xf32, #tpu.memory_space<vmem>>, %arg4: memref<128x128xf32, #tpu.memory_space<vmem>>, %arg5: memref<32x128xf32, #tpu.memory_space<vmem>>, %arg6: memref<2x18x128xf32, #tpu.memory_space<vmem>>) attributes {dimension_semantics = [], scalar_prefetch = 0 : i64, scratch_operands = 1 : i64, tpu.core_type = #tpu.core_type<tc>} {
    %c0 = arith.constant 0 : index
    %c0_0 = arith.constant 0 : index
    %0 = vector.load %arg4[%c0, %c0_0] : memref<128x128xf32, #tpu.memory_space<vmem>>, vector<128x128xf32>
    %cst = arith.constant 0.000000e+00 : f32
    %1 = vector.broadcast %cst : f32 to vector<2x18x128xf32>
    %c0_1 = arith.constant 0 : index
    %c0_2 = arith.constant 0 : index
    %c0_3 = arith.constant 0 : index
    %2 = vector.load %arg6[%c0_1, %c0_2, %c0_3] : memref<2x18x128xf32, #tpu.memory_space<vmem>>, vector<2x18x128xf32>
    tpu.vector_store %arg6[%c0_1, %c0_2, %c0_3], %1 {strides = array<i32>} : memref<2x18x128xf32, #tpu.memory_space<vmem>>, vector<2x18x128xf32>,
    %c0_4 = arith.constant 0 : index
    %c0_5 = arith.constant 0 : index
    %c0_6 = arith.constant 0 : index
    %3 = vector.load %arg0[%c0_4, %c0_5, %c0_6] : memref<2x16x128xf32, #tpu.memory_space<vmem>>, vector<2x16x128xf32>
    %c0_7 = arith.constant 0 : index
    %c1 = arith.constant 1 : index
    %c0_8 = arith.constant 0 : index
    %4 = vector.load %arg6[%c0_7, %c1, %c0_8] : memref<2x18x128xf32, #tpu.memory_space<vmem>>, vector<2x16x128xf32>
    tpu.vector_store %arg6[%c0_7, %c1, %c0_8], %3 {strides = array<i32>} : memref<2x18x128xf32, #tpu.memory_space<vmem>>, vector<2x16x128xf32>,
    %cst_9 = arith.constant 0.000000e+00 : f32
    %5 = vector.broadcast %cst_9 : f32 to vector<32x128xf32>
    %c0_10 = arith.constant 0 : index
    %c0_11 = arith.constant 0 : index
    %c0_12 = arith.constant 0 : index
    %6 = vector.load %arg6[%c0_10, %c0_11, %c0_12] : memref<2x18x128xf32, #tpu.memory_space<vmem>>, vector<2x16x128xf32>
    %7 = vector.shape_cast %6 : vector<2x16x128xf32> to vector<32x128xf32>
    %c0_13 = arith.constant 0 : index
    %c0_14 = arith.constant 0 : index
    %c0_15 = arith.constant 0 : index
    %8 = vector.load %arg1[%c0_13, %c0_14, %c0_15] : memref<3x128x128xf32, #tpu.memory_space<vmem>>, vector<1x128x128xf32>
    %9 = vector.shape_cast %8 : vector<1x128x128xf32> to vector<128x128xf32>
    %cst_16 = arith.constant dense<0.000000e+00> : vector<32x128xf32>
    %10 = tpu.matmul %7, %9, %cst_16 {dimension_numbers = #tpu.dot_dimension_numbers<[1], [0], [0], [1], [0, 0, 1, 1], [], []>} : vector<32x128xf32>, vector<128x128xf32>, vector<32x128xf32> -> vector<32x128xf32>
    %11 = arith.addf %5, %10 : vector<32x128xf32>
    %c0_17 = arith.constant 0 : index
    %c1_18 = arith.constant 1 : index
    %c0_19 = arith.constant 0 : index
    %12 = vector.load %arg6[%c0_17, %c1_18, %c0_19] : memref<2x18x128xf32, #tpu.memory_space<vmem>>, vector<2x16x128xf32>
    %13 = vector.shape_cast %12 : vector<2x16x128xf32> to vector<32x128xf32>
    %c1_20 = arith.constant 1 : index
    %c0_21 = arith.constant 0 : index
    %c0_22 = arith.constant 0 : index
    %14 = vector.load %arg1[%c1_20, %c0_21, %c0_22] : memref<3x128x128xf32, #tpu.memory_space<vmem>>, vector<1x128x128xf32>
    %15 = vector.shape_cast %14 : vector<1x128x128xf32> to vector<128x128xf32>
    %cst_23 = arith.constant dense<0.000000e+00> : vector<32x128xf32>
    %16 = tpu.matmul %13, %15, %cst_23 {dimension_numbers = #tpu.dot_dimension_numbers<[1], [0], [0], [1], [0, 0, 1, 1], [], []>} : vector<32x128xf32>, vector<128x128xf32>, vector<32x128xf32> -> vector<32x128xf32>
    %17 = arith.addf %11, %16 : vector<32x128xf32>
    %c0_24 = arith.constant 0 : index
    %c2 = arith.constant 2 : index
    %c0_25 = arith.constant 0 : index
    %18 = vector.load %arg6[%c0_24, %c2, %c0_25] : memref<2x18x128xf32, #tpu.memory_space<vmem>>, vector<2x16x128xf32>
    %19 = vector.shape_cast %18 : vector<2x16x128xf32> to vector<32x128xf32>
    %c2_26 = arith.constant 2 : index
    %c0_27 = arith.constant 0 : index
    %c0_28 = arith.constant 0 : index
    %20 = vector.load %arg1[%c2_26, %c0_27, %c0_28] : memref<3x128x128xf32, #tpu.memory_space<vmem>>, vector<1x128x128xf32>
    %21 = vector.shape_cast %20 : vector<1x128x128xf32> to vector<128x128xf32>
    %cst_29 = arith.constant dense<0.000000e+00> : vector<32x128xf32>
    %22 = tpu.matmul %19, %21, %cst_29 {dimension_numbers = #tpu.dot_dimension_numbers<[1], [0], [0], [1], [0, 0, 1, 1], [], []>} : vector<32x128xf32>, vector<128x128xf32>, vector<32x128xf32> -> vector<32x128xf32>
    %23 = arith.addf %17, %22 : vector<32x128xf32>
    %c0_30 = arith.constant 0 : index
    %c0_31 = arith.constant 0 : index
    %24 = vector.load %arg3[%c0_30, %c0_31] : memref<4x128xf32, #tpu.memory_space<vmem>>, vector<1x128xf32>
    %c1_32 = arith.constant 1 : index
    %c0_33 = arith.constant 0 : index
    %25 = vector.load %arg3[%c1_32, %c0_33] : memref<4x128xf32, #tpu.memory_space<vmem>>, vector<1x128xf32>
    %cst_34 = arith.constant dense<0.000000e+00> : vector<128xf32>
    %26 = vector.multi_reduction <add>, %23, %cst_34 [0] : vector<32x128xf32> to vector<128xf32>
    %27 = vector.shape_cast %26 : vector<128xf32> to vector<1x128xf32>
    %cst_35 = arith.constant dense<0.000000e+00> : vector<1x128xf32>
    %28 = tpu.matmul %27, %0, %cst_35 {dimension_numbers = #tpu.dot_dimension_numbers<[1], [0], [0], [1], [0, 0, 1, 1], [], []>} : vector<1x128xf32>, vector<128x128xf32>, vector<1x128xf32> -> vector<1x128xf32>
    %cst_36 = arith.constant 0.001953125 : f32
    %29 = vector.broadcast %cst_36 : f32 to vector<1x128xf32>
    %30 = arith.mulf %28, %29 : vector<1x128xf32>
    %31 = vector.broadcast %30 : vector<1x128xf32> to vector<32x128xf32>
    %32 = arith.subf %23, %31 : vector<32x128xf32>
    %33 = arith.mulf %32, %32 : vector<32x128xf32>
    %cst_37 = arith.constant dense<0.000000e+00> : vector<128xf32>
    %34 = vector.multi_reduction <add>, %33, %cst_37 [0] : vector<32x128xf32> to vector<128xf32>
    %35 = vector.shape_cast %34 : vector<128xf32> to vector<1x128xf32>
    %cst_38 = arith.constant dense<0.000000e+00> : vector<1x128xf32>
    %36 = tpu.matmul %35, %0, %cst_38 {dimension_numbers = #tpu.dot_dimension_numbers<[1], [0], [0], [1], [0, 0, 1, 1], [], []>} : vector<1x128xf32>, vector<128x128xf32>, vector<1x128xf32> -> vector<1x128xf32>
    %cst_39 = arith.constant 0.001953125 : f32
    %37 = vector.broadcast %cst_39 : f32 to vector<1x128xf32>
    %38 = arith.mulf %36, %37 : vector<1x128xf32>
    %cst_40 = arith.constant 9.99999974E-6 : f32
    %39 = vector.broadcast %cst_40 : f32 to vector<1x128xf32>
    %40 = arith.addf %38, %39 : vector<1x128xf32>
    %41 = math.rsqrt %40 : vector<1x128xf32>
    %42 = arith.mulf %24, %41 : vector<1x128xf32>
    %43 = vector.broadcast %42 : vector<1x128xf32> to vector<32x128xf32>
    %44 = arith.mulf %32, %43 : vector<32x128xf32>
    %45 = vector.broadcast %25 : vector<1x128xf32> to vector<32x128xf32>
    %46 = arith.addf %44, %45 : vector<32x128xf32>
    %cst_41 = arith.constant 0.000000e+00 : f32
    %47 = vector.broadcast %cst_41 : f32 to vector<32x128xf32>
    %48 = arith.maximumf %46, %47 : vector<32x128xf32>
    %49 = vector.shape_cast %48 : vector<32x128xf32> to vector<2x16x128xf32>
    %c0_42 = arith.constant 0 : index
    %c1_43 = arith.constant 1 : index
    %c0_44 = arith.constant 0 : index
    %50 = vector.load %arg6[%c0_42, %c1_43, %c0_44] : memref<2x18x128xf32, #tpu.memory_space<vmem>>, vector<2x16x128xf32>
    tpu.vector_store %arg6[%c0_42, %c1_43, %c0_44], %49 {strides = array<i32>} : memref<2x18x128xf32, #tpu.memory_space<vmem>>, vector<2x16x128xf32>,
    %cst_45 = arith.constant 0.000000e+00 : f32
    %51 = vector.broadcast %cst_45 : f32 to vector<32x128xf32>
    %c0_46 = arith.constant 0 : index
    %c0_47 = arith.constant 0 : index
    %c0_48 = arith.constant 0 : index
    %52 = vector.load %arg6[%c0_46, %c0_47, %c0_48] : memref<2x18x128xf32, #tpu.memory_space<vmem>>, vector<2x16x128xf32>
    %53 = vector.shape_cast %52 : vector<2x16x128xf32> to vector<32x128xf32>
    %c0_49 = arith.constant 0 : index
    %c0_50 = arith.constant 0 : index
    %c0_51 = arith.constant 0 : index
    %54 = vector.load %arg2[%c0_49, %c0_50, %c0_51] : memref<3x128x128xf32, #tpu.memory_space<vmem>>, vector<1x128x128xf32>
    %55 = vector.shape_cast %54 : vector<1x128x128xf32> to vector<128x128xf32>
    %cst_52 = arith.constant dense<0.000000e+00> : vector<32x128xf32>
    %56 = tpu.matmul %53, %55, %cst_52 {dimension_numbers = #tpu.dot_dimension_numbers<[1], [0], [0], [1], [0, 0, 1, 1], [], []>} : vector<32x128xf32>, vector<128x128xf32>, vector<32x128xf32> -> vector<32x128xf32>
    %57 = arith.addf %51, %56 : vector<32x128xf32>
    %c0_53 = arith.constant 0 : index
    %c1_54 = arith.constant 1 : index
    %c0_55 = arith.constant 0 : index
    %58 = vector.load %arg6[%c0_53, %c1_54, %c0_55] : memref<2x18x128xf32, #tpu.memory_space<vmem>>, vector<2x16x128xf32>
    %59 = vector.shape_cast %58 : vector<2x16x128xf32> to vector<32x128xf32>
    %c1_56 = arith.constant 1 : index
    %c0_57 = arith.constant 0 : index
    %c0_58 = arith.constant 0 : index
    %60 = vector.load %arg2[%c1_56, %c0_57, %c0_58] : memref<3x128x128xf32, #tpu.memory_space<vmem>>, vector<1x128x128xf32>
    %61 = vector.shape_cast %60 : vector<1x128x128xf32> to vector<128x128xf32>
    %cst_59 = arith.constant dense<0.000000e+00> : vector<32x128xf32>
    %62 = tpu.matmul %59, %61, %cst_59 {dimension_numbers = #tpu.dot_dimension_numbers<[1], [0], [0], [1], [0, 0, 1, 1], [], []>} : vector<32x128xf32>, vector<128x128xf32>, vector<32x128xf32> -> vector<32x128xf32>
    %63 = arith.addf %57, %62 : vector<32x128xf32>
    %c0_60 = arith.constant 0 : index
    %c2_61 = arith.constant 2 : index
    %c0_62 = arith.constant 0 : index
    %64 = vector.load %arg6[%c0_60, %c2_61, %c0_62] : memref<2x18x128xf32, #tpu.memory_space<vmem>>, vector<2x16x128xf32>
    %65 = vector.shape_cast %64 : vector<2x16x128xf32> to vector<32x128xf32>
    %c2_63 = arith.constant 2 : index
    %c0_64 = arith.constant 0 : index
    %c0_65 = arith.constant 0 : index
    %66 = vector.load %arg2[%c2_63, %c0_64, %c0_65] : memref<3x128x128xf32, #tpu.memory_space<vmem>>, vector<1x128x128xf32>
    %67 = vector.shape_cast %66 : vector<1x128x128xf32> to vector<128x128xf32>
    %cst_66 = arith.constant dense<0.000000e+00> : vector<32x128xf32>
    %68 = tpu.matmul %65, %67, %cst_66 {dimension_numbers = #tpu.dot_dimension_numbers<[1], [0], [0], [1], [0, 0, 1, 1], [], []>} : vector<32x128xf32>, vector<128x128xf32>, vector<32x128xf32> -> vector<32x128xf32>
    %69 = arith.addf %63, %68 : vector<32x128xf32>
    %c2_67 = arith.constant 2 : index
    %c0_68 = arith.constant 0 : index
    %70 = vector.load %arg3[%c2_67, %c0_68] : memref<4x128xf32, #tpu.memory_space<vmem>>, vector<1x128xf32>
    %c3 = arith.constant 3 : index
    %c0_69 = arith.constant 0 : index
    %71 = vector.load %arg3[%c3, %c0_69] : memref<4x128xf32, #tpu.memory_space<vmem>>, vector<1x128xf32>
    %c0_70 = arith.constant 0 : index
    %c0_71 = arith.constant 0 : index
    %c0_72 = arith.constant 0 : index
    %72 = vector.load %arg0[%c0_70, %c0_71, %c0_72] : memref<2x16x128xf32, #tpu.memory_space<vmem>>, vector<2x16x128xf32>
    %73 = vector.shape_cast %72 : vector<2x16x128xf32> to vector<32x128xf32>
    %cst_73 = arith.constant dense<0.000000e+00> : vector<128xf32>
    %74 = vector.multi_reduction <add>, %69, %cst_73 [0] : vector<32x128xf32> to vector<128xf32>
    %75 = vector.shape_cast %74 : vector<128xf32> to vector<1x128xf32>
    %cst_74 = arith.constant dense<0.000000e+00> : vector<1x128xf32>
    %76 = tpu.matmul %75, %0, %cst_74 {dimension_numbers = #tpu.dot_dimension_numbers<[1], [0], [0], [1], [0, 0, 1, 1], [], []>} : vector<1x128xf32>, vector<128x128xf32>, vector<1x128xf32> -> vector<1x128xf32>
    %cst_75 = arith.constant 0.001953125 : f32
    %77 = vector.broadcast %cst_75 : f32 to vector<1x128xf32>
    %78 = arith.mulf %76, %77 : vector<1x128xf32>
    %79 = vector.broadcast %78 : vector<1x128xf32> to vector<32x128xf32>
    %80 = arith.subf %69, %79 : vector<32x128xf32>
    %81 = arith.mulf %80, %80 : vector<32x128xf32>
    %cst_76 = arith.constant dense<0.000000e+00> : vector<128xf32>
    %82 = vector.multi_reduction <add>, %81, %cst_76 [0] : vector<32x128xf32> to vector<128xf32>
    %83 = vector.shape_cast %82 : vector<128xf32> to vector<1x128xf32>
    %cst_77 = arith.constant dense<0.000000e+00> : vector<1x128xf32>
    %84 = tpu.matmul %83, %0, %cst_77 {dimension_numbers = #tpu.dot_dimension_numbers<[1], [0], [0], [1], [0, 0, 1, 1], [], []>} : vector<1x128xf32>, vector<128x128xf32>, vector<1x128xf32> -> vector<1x128xf32>
    %cst_78 = arith.constant 0.001953125 : f32
    %85 = vector.broadcast %cst_78 : f32 to vector<1x128xf32>
    %86 = arith.mulf %84, %85 : vector<1x128xf32>
    %cst_79 = arith.constant 9.99999974E-6 : f32
    %87 = vector.broadcast %cst_79 : f32 to vector<1x128xf32>
    %88 = arith.addf %86, %87 : vector<1x128xf32>
    %89 = math.rsqrt %88 : vector<1x128xf32>
    %90 = arith.mulf %70, %89 : vector<1x128xf32>
    %91 = vector.broadcast %90 : vector<1x128xf32> to vector<32x128xf32>
    %92 = arith.mulf %80, %91 : vector<32x128xf32>
    %93 = vector.broadcast %71 : vector<1x128xf32> to vector<32x128xf32>
    %94 = arith.addf %92, %93 : vector<32x128xf32>
    %95 = arith.addf %94, %73 : vector<32x128xf32>
    %cst_80 = arith.constant 0.000000e+00 : f32
    %96 = vector.broadcast %cst_80 : f32 to vector<32x128xf32>
    %97 = arith.maximumf %95, %96 : vector<32x128xf32>
    %c0_81 = arith.constant 0 : index
    %c0_82 = arith.constant 0 : index
    %98 = vector.load %arg5[%c0_81, %c0_82] : memref<32x128xf32, #tpu.memory_space<vmem>>, vector<32x128xf32>
    tpu.vector_store %arg5[%c0_81, %c0_82], %97 {strides = array<i32>} : memref<32x128xf32, #tpu.memory_space<vmem>>, vector<32x128xf32>,
    return
  }
}

</mosaic_0001>

<llo_original>
// kernel: tile.23
$region0: #{tile.23}
  #allocation0 [shape = 's32[1]{0}', space=sflag, size = 0x4, scoped, tag = 'scoped memory for tile.23']
  %s0 = inlined_call_operand.vmem [shape: f32[8], index: 0, kind: input, shape index: {}]
  %s1 = inlined_call_operand.vmem [shape: f32[16,8], index: 1, kind: output, shape index: {}]
  // Predicated region
  $region2: #{tile.23} parent=0 // pred_check
    _
  $region3: #{tile.23} parent=0 // pred_check_branch
    %3 = sbr.rel (0) target = $region5
  $region4: #{tile.23} parent=0 // pred_region
    _
  $region5: #{tile.23} parent=0 // pred_fallthru
    _
  %v4 = vld [vmem:[%s0] ss:$0 sm:$0xff]
  %5 = vst [vmem:[%s1] sm:$0xff] %v4
  %s6 = scalar_lea.vmem %s1, 8
  %7 = vst [vmem:[%s6] sm:$0xff] %v4

// kernel: tile.36
$region0: #{tile.36}
  %s0 = inlined_call_operand.vmem [shape: f32[16,8], index: 0, kind: input, shape index: {}]
  %s1 = inlined_call_operand.vmem [shape: f32[1,128], index: 1, kind: output, shape index: {}]
  $region1: #{tile.36} parent=0
    #allocation0 [shape = 'u8[4096]{0}', space=vmem, size = 0x1000, scoped, tag = 'scoped mem for output reshape']
    %v2 = vld [vmem:[%s0] sm:$0x1]
    %vm3 = vcmask 64512
    %4 = vst.msk [vmem:[#allocation0] sm:$0x1] %vm3, %v2
    %s5 = scalar_lea.vmem %s0, 15
    %v6 = vld [vmem:[%s5] sm:$0x1]
    %7 = vrot.lane.b32.xlu0 %v6, 120
    %v8 = vpop.permute.xlu0 %7
    %vm9 = vcmask 1048512
    %10 = vst.msk [vmem:[#allocation0] sm:$0x1] %vm9, %v8
    %s11 = scalar_lea.vmem %s0, 14
    %v12 = vld [vmem:[%s11] sm:$0x1]
    %13 = vrot.lane.b32.xlu0 %v12, 112
    %v14 = vpop.permute.xlu0 %13
    %vm15 = vcmask 982912
    %16 = vst.msk [vmem:[#allocation0] sm:$0x1] %vm15, %v14
    %s17 = scalar_lea.vmem %s0, 13
    %v18 = vld [vmem:[%s17] sm:$0x1]
    %19 = vrot.lane.b32.xlu0 %v18, 104
    %v20 = vpop.permute.xlu0 %19
    %vm21 = vcmask 917312
    %22 = vst.msk [vmem:[#allocation0] sm:$0x1] %vm21, %v20
    %s23 = scalar_lea.vmem %s0, 12
    %v24 = vld [vmem:[%s23] sm:$0x1]
    %25 = vrot.lane.b32.xlu0 %v24, 96
    %v26 = vpop.permute.xlu0 %25
    %vm27 = vcmask 851712
    %28 = vst.msk [vmem:[#allocation0] sm:$0x1] %vm27, %v26
    %s29 = scalar_lea.vmem %s0, 11
    %v30 = vld [vmem:[%s29] sm:$0x1]
    %31 = vrot.lane.b32.xlu0 %v30, 88
    %v32 = vpop.permute.xlu0 %31
    %vm33 = vcmask 786112
    %34 = vst.msk [vmem:[#allocation0] sm:$0x1] %vm33, %v32
    %s35 = scalar_lea.vmem %s0, 10
    %v36 = vld [vmem:[%s35] sm:$0x1]
    %37 = vrot.lane.b32.xlu0 %v36, 80
    %v38 = vpop.permute.xlu0 %37
    %vm39 = vcmask 720512
    %40 = vst.msk [vmem:[#allocation0] sm:$0x1] %vm39, %v38
    %s41 = scalar_lea.vmem %s0, 9
    %v42 = vld [vmem:[%s41] sm:$0x1]
    %43 = vrot.lane.b32.xlu0 %v42, 72
    %v44 = vpop.permute.xlu0 %43
    %vm45 = vcmask 654912
    %46 = vst.msk [vmem:[#allocation0] sm:$0x1] %vm45, %v44
    %s47 = scalar_lea.vmem %s0, 8
    %v48 = vld [vmem:[%s47] sm:$0x1]
    %49 = vrot.lane.b32.xlu0 %v48, 64
    %v50 = vpop.permute.xlu0 %49
    %vm51 = vcmask 589312
    %52 = vst.msk [vmem:[#allocation0] sm:$0x1] %vm51, %v50
    %s53 = scalar_lea.vmem %s0, 7
    %v54 = vld [vmem:[%s53] sm:$0x1]
    %55 = vrot.lane.b32.xlu0 %v54, 56
    %v56 = vpop.permute.xlu0 %55
    %vm57 = vcmask 523712
    %58 = vst.msk [vmem:[#allocation0] sm:$0x1] %vm57, %v56
    %s59 = scalar_lea.vmem %s0, 6
    %v60 = vld [vmem:[%s59] sm:$0x1]
    %61 = vrot.lane.b32.xlu0 %v60, 48
    %v62 = vpop.permute.xlu0 %61
    %vm63 = vcmask 458112
    %64 = vst.msk [vmem:[#allocation0] sm:$0x1] %vm63, %v62
    %s65 = scalar_lea.vmem %s0, 5
    %v66 = vld [vmem:[%s65] sm:$0x1]
    %67 = vrot.lane.b32.xlu0 %v66, 40
    %v68 = vpop.permute.xlu0 %67
    %vm69 = vcmask 392512
    %70 = vst.msk [vmem:[#allocation0] sm:$0x1] %vm69, %v68
    %s71 = scalar_lea.vmem %s0, 4
    %v72 = vld [vmem:[%s71] sm:$0x1]
    %73 = vrot.lane.b32.xlu0 %v72, 32
    %v74 = vpop.permute.xlu0 %73
    %vm75 = vcmask 326912
    %76 = vst.msk [vmem:[#allocation0] sm:$0x1] %vm75, %v74
    %s77 = scalar_lea.vmem %s0, 3
    %v78 = vld [vmem:[%s77] sm:$0x1]
    %79 = vrot.lane.b32.xlu0 %v78, 24
    %v80 = vpop.permute.xlu0 %79
    %vm81 = vcmask 261312
    %82 = vst.msk [vmem:[#allocation0] sm:$0x1] %vm81, %v80
    %s83 = scalar_lea.vmem %s0, 2
    %v84 = vld [vmem:[%s83] sm:$0x1]
    %85 = vrot.lane.b32.xlu0 %v84, 16
    %v86 = vpop.permute.xlu0 %85
    %vm87 = vcmask 195712
    %88 = vst.msk [vmem:[#allocation0] sm:$0x1] %vm87, %v86
    %s89 = scalar_lea.vmem %s0, 1
    %v90 = vld [vmem:[%s89] sm:$0x1]
    %91 = vrot.lane.b32.xlu0 %v90, 8
    %v92 = vpop.permute.xlu0 %91
    %vm93 = vcmask 130112
    %94 = vst.msk [vmem:[#allocation0] sm:$0x1] %vm93, %v92
    %s96 = sshllo.u32 0, 1
    %v98 = vld [vmem:[#allocation0] sm:%s96]
    %s99 = sshllo.u32 0, 1
    %100 = vst [vmem:[%s1] sm:%s99] %v98

// kernel: basic_block1.1
$region0: #{basic_block1.1}
  #allocation0 [shape = 'u32[]', space=smem, size = 0x4, offset = 0x4, fixed_abs, tag = 'smem constant byte address 0x4 - core index']
  #allocation1 [shape = 'u32[144,128]{1,0:T(1,128)}', space=vmem, size = 0x12000, scoped, tag = 'internal scratch']
  #allocation2 [shape = 'f32[2,18,128]{2,1,0:T(8,128)}', space=vmem, size = 0x6000, scoped, tag = 'scratch operand']
  %s0 = inlined_call_operand.vmem [shape: f32[2,16,128], index: 0, kind: input, shape index: {}]
  %s1 = inlined_call_operand.vmem [shape: f32[3,128,128], index: 1, kind: input, shape index: {}]
  %s2 = inlined_call_operand.vmem [shape: f32[3,128,128], index: 2, kind: input, shape index: {}]
  %s3 = inlined_call_operand.vmem [shape: f32[4,128], index: 3, kind: input, shape index: {}]
  %s4 = inlined_call_operand.vmem [shape: f32[128,128], index: 4, kind: input, shape index: {}]
  %s5 = inlined_call_operand.vmem [shape: f32[32,128], index: 5, kind: output, shape index: {}]
  %s6 = sld [smem:[#allocation0]]
  $region30: #{basic_block1.1} parent=0
    _
  %s8 = ssub.s32 1, %s6
  %s9 = scalar_select 0, %s8, %s6
  // Predicated region
  $region2: #{basic_block1.1} parent=0 // pred_check
    _
  $region3: #{basic_block1.1} parent=0 // pred_check_branch
    %11 = sbr.rel (0) target = $region5
  $region4: #{basic_block1.1} parent=0 // pred_region
    _
  $region5: #{basic_block1.1} parent=0 // pred_fallthru
    _
  // Predicated region
  $region6: #{basic_block1.1} parent=0 // pred_check
    _
  $region7: #{basic_block1.1} parent=0 // pred_check_branch
    %13 = sbr.rel (0) target = $region9
  $region8: #{basic_block1.1} parent=0 // pred_region
    _
  $region9: #{basic_block1.1} parent=0 // pred_fallthru
    _
  // Predicated region
  $region10: #{basic_block1.1} parent=0 // pred_check
    _
  $region11: #{basic_block1.1} parent=0 // pred_check_branch
    %15 = sbr.rel (0) target = $region13
  $region12: #{basic_block1.1} parent=0 // pred_region
    _
  $region13: #{basic_block1.1} parent=0 // pred_fallthru
    _
  // Predicated region
  $region14: #{basic_block1.1} parent=0 // pred_check
    _
  $region15: #{basic_block1.1} parent=0 // pred_check_branch
    %17 = sbr.rel (0) target = $region17
  $region16: #{basic_block1.1} parent=0 // pred_region
    _
  $region17: #{basic_block1.1} parent=0 // pred_fallthru
    _
  // Predicated region
  $region18: #{basic_block1.1} parent=0 // pred_check
    _
  $region19: #{basic_block1.1} parent=0 // pred_check_branch
    %19 = sbr.rel (0) target = $region21
  $region20: #{basic_block1.1} parent=0 // pred_region
    _
  $region21: #{basic_block1.1} parent=0 // pred_fallthru
    _
  %v20 = vld [vmem:[%s4] sm:$0xff]
  %v21 = vld [vmem:[%s4 + $0x8] sm:$0xff]
  %v22 = vld [vmem:[%s4 + $0x10] sm:$0xff]
  %v23 = vld [vmem:[%s4 + $0x18] sm:$0xff]
  %v24 = vld [vmem:[%s4 + $0x20] sm:$0xff]
  %v25 = vld [vmem:[%s4 + $0x28] sm:$0xff]
  %v26 = vld [vmem:[%s4 + $0x30] sm:$0xff]
  %v27 = vld [vmem:[%s4 + $0x38] sm:$0xff]
  %v28 = vld [vmem:[%s4 + $0x40] sm:$0xff]
  %v29 = vld [vmem:[%s4 + $0x48] sm:$0xff]
  %v30 = vld [vmem:[%s4 + $0x50] sm:$0xff]
  %v31 = vld [vmem:[%s4 + $0x58] sm:$0xff]
  %v32 = vld [vmem:[%s4 + $0x60] sm:$0xff]
  %v33 = vld [vmem:[%s4 + $0x68] sm:$0xff]
  %v34 = vld [vmem:[%s4 + $0x70] sm:$0xff]
  %v35 = vld [vmem:[%s4 + $0x78] sm:$0xff]
  %36 = vst [vmem:[#allocation2] sm:$0xff] 0.0
  %37 = vst [vmem:[#allocation2 + $0x8] sm:$0xff] 0.0
  %38 = vst [vmem:[#allocation2 + $0x10] sm:$0x3] 0.0
  %39 = vst [vmem:[#allocation2 + $0x18] sm:$0xff] 0.0
  %40 = vst [vmem:[#allocation2 + $0x20] sm:$0xff] 0.0
  %41 = vst [vmem:[#allocation2 + $0x28] sm:$0x3] 0.0
  %v42 = vld [vmem:[%s0] sm:$0xff]
  %v43 = vld [vmem:[%s0 + $0x8] sm:$0xff]
  %v44 = vld [vmem:[%s0 + $0x10] sm:$0xff]
  %v45 = vld [vmem:[%s0 + $0x18] sm:$0xff]
  %46 = vst [vmem:[#allocation2 + $0x1] sm:$0xff] %v42
  %47 = vst [vmem:[#allocation2 + $0x9] sm:$0xff] %v43
  %48 = vst [vmem:[#allocation2 + $0x19] sm:$0xff] %v44
  %49 = vst [vmem:[#allocation2 + $0x21] sm:$0xff] %v45
  %v50 = vld [vmem:[#allocation2] sm:$0xff]
  %v51 = vld [vmem:[#allocation2 + $0x8] sm:$0xff]
  %v52 = vld [vmem:[#allocation2 + $0x18] sm:$0xff]
  %v53 = vld [vmem:[#allocation2 + $0x20] sm:$0xff]
  %v54 = vld [vmem:[%s1] sm:$0xff]
  %v55 = vld [vmem:[%s1 + $0x8] sm:$0xff]
  %v56 = vld [vmem:[%s1 + $0x10] sm:$0xff]
  %v57 = vld [vmem:[%s1 + $0x18] sm:$0xff]
  %v58 = vld [vmem:[%s1 + $0x20] sm:$0xff]
  %v59 = vld [vmem:[%s1 + $0x28] sm:$0xff]
  %v60 = vld [vmem:[%s1 + $0x30] sm:$0xff]
  %v61 = vld [vmem:[%s1 + $0x38] sm:$0xff]
  %v62 = vld [vmem:[%s1 + $0x40] sm:$0xff]
  %v63 = vld [vmem:[%s1 + $0x48] sm:$0xff]
  %v64 = vld [vmem:[%s1 + $0x50] sm:$0xff]
  %v65 = vld [vmem:[%s1 + $0x58] sm:$0xff]
  %v66 = vld [vmem:[%s1 + $0x60] sm:$0xff]
  %v67 = vld [vmem:[%s1 + $0x68] sm:$0xff]
  %v68 = vld [vmem:[%s1 + $0x70] sm:$0xff]
  %v69 = vld [vmem:[%s1 + $0x78] sm:$0xff]
  %v70 = vld [vmem:[#allocation2 + $0x1] sm:$0xff]
  %v71 = vld [vmem:[#allocation2 + $0x9] sm:$0xff]
  %v72 = vld [vmem:[#allocation2 + $0x19] sm:$0xff]
  %v73 = vld [vmem:[#allocation2 + $0x21] sm:$0xff]
  %s74 = scalar_lea.vmem %s1, 128
  %v75 = vld [vmem:[%s74] sm:$0xff]
  %v76 = vld [vmem:[%s74 + $0x8] sm:$0xff]
  %v77 = vld [vmem:[%s74 + $0x10] sm:$0xff]
  %v78 = vld [vmem:[%s74 + $0x18] sm:$0xff]
  %v79 = vld [vmem:[%s74 + $0x20] sm:$0xff]
  %v80 = vld [vmem:[%s74 + $0x28] sm:$0xff]
  %v81 = vld [vmem:[%s74 + $0x30] sm:$0xff]
  %v82 = vld [vmem:[%s74 + $0x38] sm:$0xff]
  %v83 = vld [vmem:[%s74 + $0x40] sm:$0xff]
  %v84 = vld [vmem:[%s74 + $0x48] sm:$0xff]
  %v85 = vld [vmem:[%s74 + $0x50] sm:$0xff]
  %v86 = vld [vmem:[%s74 + $0x58] sm:$0xff]
  %v87 = vld [vmem:[%s74 + $0x60] sm:$0xff]
  %v88 = vld [vmem:[%s74 + $0x68] sm:$0xff]
  %v89 = vld [vmem:[%s74 + $0x70] sm:$0xff]
  %v90 = vld [vmem:[%s74 + $0x78] sm:$0xff]
  %91 = vmatprep.subr.mxu0 0.0
  %92 = vmatpush1.msra.mxu0 %v75
  %93 = vmatprep.subr.mxu0 0.0
  %94 = vmatpush1.msra.mxu0 %v76
  %95 = vmatprep.subr.mxu0 0.0
  %96 = vmatpush1.msra.mxu0 %v77
  %97 = vmatprep.subr.mxu0 0.0
  %98 = vmatpush1.msra.mxu0 %v78
  %99 = vmatprep.subr.mxu0 0.0
  %100 = vmatpush1.msra.mxu0 %v79
  %101 = vmatprep.subr.mxu0 0.0
  %102 = vmatpush1.msra.mxu0 %v80
  %103 = vmatprep.subr.mxu0 0.0
  %104 = vmatpush1.msra.mxu0 %v81
  %105 = vmatprep.subr.mxu0 0.0
  %106 = vmatpush1.msra.mxu0 %v82
  %107 = vmatprep.subr.mxu0 0.0
  %108 = vmatpush1.msra.mxu0 %v83
  %109 = vmatprep.subr.mxu0 0.0
  %110 = vmatpush1.msra.mxu0 %v84
  %111 = vmatprep.subr.mxu0 0.0
  %112 = vmatpush1.msra.mxu0 %v85
  %113 = vmatprep.subr.mxu0 0.0
  %114 = vmatpush1.msra.mxu0 %v86
  %115 = vmatprep.subr.mxu0 0.0
  %116 = vmatpush1.msra.mxu0 %v87
  %117 = vmatprep.subr.mxu0 0.0
  %118 = vmatpush1.msra.mxu0 %v88
  %119 = vmatprep.subr.mxu0 0.0
  %120 = vmatpush1.msra.mxu0 %v89
  %121 = vmatprep.subr.mxu0 0.0
  %122 = vmatpush1.msra.mxu0 %v90
  %123 = vmatprep.subr.mxu0 0.0
  %124 = vmatpush1.msra.mxu0 0.0
  %125 = vmatprep.subr.mxu0 0.0
  %126 = vmatpush1.msra.mxu0 0.0
  %127 = vmatprep.subr.mxu0 0.0
  %128 = vmatpush1.msra.mxu0 0.0
  %129 = vmatprep.subr.mxu0 0.0
  %130 = vmatpush1.msra.mxu0 0.0
  %131 = vmatprep.subr.mxu0 0.0
  %132 = vmatpush1.msra.mxu0 0.0
  %133 = vmatprep.subr.mxu0 0.0
  %134 = vmatpush1.msra.mxu0 0.0
  %135 = vmatprep.subr.mxu0 0.0
  %136 = vmatpush1.msra.mxu0 0.0
  %137 = vmatprep.subr.mxu0 0.0
  %138 = vmatpush1.msra.mxu0 0.0
  %139 = vmatprep.subr.mxu0 0.0
  %140 = vmatpush1.msra.mxu0 0.0
  %141 = vmatprep.subr.mxu0 0.0
  %142 = vmatpush1.msra.mxu0 0.0
  %143 = vmatprep.subr.mxu0 0.0
  %144 = vmatpush1.msra.mxu0 0.0
  %145 = vmatprep.subr.mxu0 0.0
  %146 = vmatpush1.msra.mxu0 0.0
  %147 = vmatprep.subr.mxu0 0.0
  %148 = vmatpush1.msra.mxu0 0.0
  %149 = vmatprep.subr.mxu0 0.0
  %150 = vmatpush1.msra.mxu0 0.0
  %151 = vmatprep.subr.mxu0 0.0
  %152 = vmatpush1.msra.mxu0 0.0
  %153 = vmatprep.subr.mxu0 0.0
  %154 = vmatpush1.msra.mxu0 0.0
  %155 = vmatprep.mubr.f32.mxu0 0.0
  %156 = vmatmul.mubr.f32.gmra.mrb[0].mxu0 %v70
  %v157 = vpop.f32.mrb[0].mxu0
  %v158 = vadd.f32 0.0, %v157
  %v159 = vpop.f32.mrb[0].mxu0
  %160 = vmatprep.mubr.f32.mxu0 0.0
  %161 = vmatmul.mubr.f32.gmra.mrb[0].mxu0 %v71
  %v162 = vpop.f32.mrb[0].mxu0
  %v163 = vadd.f32 0.0, %v162
  %v164 = vpop.f32.mrb[0].mxu0
  %165 = vmatprep.mubr.f32.mxu0 0.0
  %166 = vmatmul.mubr.f32.gmra.mrb[0].mxu0 %v72
  %v167 = vpop.f32.mrb[0].mxu0
  %v168 = vadd.f32 0.0, %v167
  %v169 = vpop.f32.mrb[0].mxu0
  %170 = vmatprep.mubr.f32.mxu0 0.0
  %171 = vmatmul.mubr.f32.gmra.mrb[0].mxu0 %v73
  %v172 = vpop.f32.mrb[0].mxu0
  %v173 = vadd.f32 0.0, %v172
  %v174 = vpop.f32.mrb[0].mxu0
  %175 = vdwg.mxu0
  %176 = vmatprep.subr.mxu0 0.0
  %177 = vmatpush1.msra.mxu0 %v54
  %178 = vmatprep.subr.mxu0 0.0
  %179 = vmatpush1.msra.mxu0 %v55
  %180 = vmatprep.subr.mxu0 0.0
  %181 = vmatpush1.msra.mxu0 %v56
  %182 = vmatprep.subr.mxu0 0.0
  %183 = vmatpush1.msra.mxu0 %v57
  %184 = vmatprep.subr.mxu0 0.0
  %185 = vmatpush1.msra.mxu0 %v58
  %186 = vmatprep.subr.mxu0 0.0
  %187 = vmatpush1.msra.mxu0 %v59
  %188 = vmatprep.subr.mxu0 0.0
  %189 = vmatpush1.msra.mxu0 %v60
  %190 = vmatprep.subr.mxu0 0.0
  %191 = vmatpush1.msra.mxu0 %v61
  %192 = vmatprep.subr.mxu0 0.0
  %193 = vmatpush1.msra.mxu0 %v62
  %194 = vmatprep.subr.mxu0 0.0
  %195 = vmatpush1.msra.mxu0 %v63
  %196 = vmatprep.subr.mxu0 0.0
  %197 = vmatpush1.msra.mxu0 %v64
  %198 = vmatprep.subr.mxu0 0.0
  %199 = vmatpush1.msra.mxu0 %v65
  %200 = vmatprep.subr.mxu0 0.0
  %201 = vmatpush1.msra.mxu0 %v66
  %202 = vmatprep.subr.mxu0 0.0
  %203 = vmatpush1.msra.mxu0 %v67
  %204 = vmatprep.subr.mxu0 0.0
  %205 = vmatpush1.msra.mxu0 %v68
  %206 = vmatprep.subr.mxu0 0.0
  %207 = vmatpush1.msra.mxu0 %v69
  %208 = vmatprep.subr.mxu0 0.0
  %209 = vmatpush1.msra.mxu0 0.0
  %210 = vmatprep.subr.mxu0 0.0
  %211 = vmatpush1.msra.mxu0 0.0
  %212 = vmatprep.subr.mxu0 0.0
  %213 = vmatpush1.msra.mxu0 0.0
  %214 = vmatprep.subr.mxu0 0.0
  %215 = vmatpush1.msra.mxu0 0.0
  %216 = vmatprep.subr.mxu0 0.0
  %217 = vmatpush1.msra.mxu0 0.0
  %218 = vmatprep.subr.mxu0 0.0
  %219 = vmatpush1.msra.mxu0 0.0
  %220 = vmatprep.subr.mxu0 0.0
  %221 = vmatpush1.msra.mxu0 0.0
  %222 = vmatprep.subr.mxu0 0.0
  %223 = vmatpush1.msra.mxu0 0.0
  %224 = vmatprep.subr.mxu0 0.0
  %225 = vmatpush1.msra.mxu0 0.0
  %226 = vmatprep.subr.mxu0 0.0
  %227 = vmatpush1.msra.mxu0 0.0
  %228 = vmatprep.subr.mxu0 0.0
  %229 = vmatpush1.msra.mxu0 0.0
  %230 = vmatprep.subr.mxu0 0.0
  %231 = vmatpush1.msra.mxu0 0.0
  %232 = vmatprep.subr.mxu0 0.0
  %233 = vmatpush1.msra.mxu0 0.0
  %234 = vmatprep.subr.mxu0 0.0
  %235 = vmatpush1.msra.mxu0 0.0
  %236 = vmatprep.subr.mxu0 0.0
  %237 = vmatpush1.msra.mxu0 0.0
  %238 = vmatprep.subr.mxu0 0.0
  %239 = vmatpush1.msra.mxu0 0.0
  %240 = vmatprep.mubr.f32.mxu0 0.0
  %241 = vmatmul.mubr.f32.gmra.mrb[0].mxu0 %v50
  %v242 = vpop.f32.mrb[0].mxu0
  %v243 = vadd.f32 %v158, %v242
  %v244 = vpop.f32.mrb[0].mxu0
  %245 = vmatprep.mubr.f32.mxu0 0.0
  %246 = vmatmul.mubr.f32.gmra.mrb[0].mxu0 %v51
  %v247 = vpop.f32.mrb[0].mxu0
  %v248 = vadd.f32 %v163, %v247
  %v249 = vpop.f32.mrb[0].mxu0
  %250 = vmatprep.mubr.f32.mxu0 0.0
  %251 = vmatmul.mubr.f32.gmra.mrb[0].mxu0 %v52
  %v252 = vpop.f32.mrb[0].mxu0
  %v253 = vadd.f32 %v168, %v252
  %v254 = vpop.f32.mrb[0].mxu0
  %255 = vmatprep.mubr.f32.mxu0 0.0
  %256 = vmatmul.mubr.f32.gmra.mrb[0].mxu0 %v53
  %v257 = vpop.f32.mrb[0].mxu0
  %v258 = vadd.f32 %v173, %v257
  %v259 = vpop.f32.mrb[0].mxu0
  %260 = vdwg.mxu0
  %v261 = vld [vmem:[#allocation2 + $0x2] sm:$0xff]
  %v262 = vld [vmem:[#allocation2 + $0xa] sm:$0xff]
  %v263 = vld [vmem:[#allocation2 + $0x1a] sm:$0xff]
  %v264 = vld [vmem:[#allocation2 + $0x22] sm:$0xff]
  %s265 = scalar_lea.vmem %s1, 256
  %v266 = vld [vmem:[%s265] sm:$0xff]
  %v267 = vld [vmem:[%s265 + $0x8] sm:$0xff]
  %v268 = vld [vmem:[%s265 + $0x10] sm:$0xff]
  %v269 = vld [vmem:[%s265 + $0x18] sm:$0xff]
  %v270 = vld [vmem:[%s265 + $0x20] sm:$0xff]
  %v271 = vld [vmem:[%s265 + $0x28] sm:$0xff]
  %v272 = vld [vmem:[%s265 + $0x30] sm:$0xff]
  %v273 = vld [vmem:[%s265 + $0x38] sm:$0xff]
  %v274 = vld [vmem:[%s265 + $0x40] sm:$0xff]
  %v275 = vld [vmem:[%s265 + $0x48] sm:$0xff]
  %v276 = vld [vmem:[%s265 + $0x50] sm:$0xff]
  %v277 = vld [vmem:[%s265 + $0x58] sm:$0xff]
  %v278 = vld [vmem:[%s265 + $0x60] sm:$0xff]
  %v279 = vld [vmem:[%s265 + $0x68] sm:$0xff]
  %v280 = vld [vmem:[%s265 + $0x70] sm:$0xff]
  %v281 = vld [vmem:[%s265 + $0x78] sm:$0xff]
  %282 = vmatprep.subr.mxu0 0.0
  %283 = vmatpush1.msra.mxu0 %v266
  %284 = vmatprep.subr.mxu0 0.0
  %285 = vmatpush1.msra.mxu0 %v267
  %286 = vmatprep.subr.mxu0 0.0
  %287 = vmatpush1.msra.mxu0 %v268
  %288 = vmatprep.subr.mxu0 0.0
  %289 = vmatpush1.msra.mxu0 %v269
  %290 = vmatprep.subr.mxu0 0.0
  %291 = vmatpush1.msra.mxu0 %v270
  %292 = vmatprep.subr.mxu0 0.0
  %293 = vmatpush1.msra.mxu0 %v271
  %294 = vmatprep.subr.mxu0 0.0
  %295 = vmatpush1.msra.mxu0 %v272
  %296 = vmatprep.subr.mxu0 0.0
  %297 = vmatpush1.msra.mxu0 %v273
  %298 = vmatprep.subr.mxu0 0.0
  %299 = vmatpush1.msra.mxu0 %v274
  %300 = vmatprep.subr.mxu0 0.0
  %301 = vmatpush1.msra.mxu0 %v275
  %302 = vmatprep.subr.mxu0 0.0
  %303 = vmatpush1.msra.mxu0 %v276
  %304 = vmatprep.subr.mxu0 0.0
  %305 = vmatpush1.msra.mxu0 %v277
  %306 = vmatprep.subr.mxu0 0.0
  %307 = vmatpush1.msra.mxu0 %v278
  %308 = vmatprep.subr.mxu0 0.0
  %309 = vmatpush1.msra.mxu0 %v279
  %310 = vmatprep.subr.mxu0 0.0
  %311 = vmatpush1.msra.mxu0 %v280
  %312 = vmatprep.subr.mxu0 0.0
  %313 = vmatpush1.msra.mxu0 %v281
  %314 = vmatprep.subr.mxu0 0.0
  %315 = vmatpush1.msra.mxu0 0.0
  %316 = vmatprep.subr.mxu0 0.0
  %317 = vmatpush1.msra.mxu0 0.0
  %318 = vmatprep.subr.mxu0 0.0
  %319 = vmatpush1.msra.mxu0 0.0
  %320 = vmatprep.subr.mxu0 0.0
  %321 = vmatpush1.msra.mxu0 0.0
  %322 = vmatprep.subr.mxu0 0.0
  %323 = vmatpush1.msra.mxu0 0.0
  %324 = vmatprep.subr.mxu0 0.0
  %325 = vmatpush1.msra.mxu0 0.0
  %326 = vmatprep.subr.mxu0 0.0
  %327 = vmatpush1.msra.mxu0 0.0
  %328 = vmatprep.subr.mxu0 0.0
  %329 = vmatpush1.msra.mxu0 0.0
  %330 = vmatprep.subr.mxu0 0.0
  %331 = vmatpush1.msra.mxu0 0.0
  %332 = vmatprep.subr.mxu0 0.0
  %333 = vmatpush1.msra.mxu0 0.0
  %334 = vmatprep.subr.mxu0 0.0
  %335 = vmatpush1.msra.mxu0 0.0
  %336 = vmatprep.subr.mxu0 0.0
  %337 = vmatpush1.msra.mxu0 0.0
  %338 = vmatprep.subr.mxu0 0.0
  %339 = vmatpush1.msra.mxu0 0.0
  %340 = vmatprep.subr.mxu0 0.0
  %341 = vmatpush1.msra.mxu0 0.0
  %342 = vmatprep.subr.mxu0 0.0
  %343 = vmatpush1.msra.mxu0 0.0
  %344 = vmatprep.subr.mxu0 0.0
  %345 = vmatpush1.msra.mxu0 0.0
  %346 = vmatprep.mubr.f32.mxu0 0.0
  %347 = vmatmul.mubr.f32.gmra.mrb[0].mxu0 %v261
  %v348 = vpop.f32.mrb[0].mxu0
  %v349 = vadd.f32 0.0, %v348
  %v350 = vpop.f32.mrb[0].mxu0
  %351 = vmatprep.mubr.f32.mxu0 0.0
  %352 = vmatmul.mubr.f32.gmra.mrb[0].mxu0 %v262
  %v353 = vpop.f32.mrb[0].mxu0
  %v354 = vadd.f32 0.0, %v353
  %v355 = vpop.f32.mrb[0].mxu0
  %356 = vmatprep.mubr.f32.mxu0 0.0
  %357 = vmatmul.mubr.f32.gmra.mrb[0].mxu0 %v263
  %v358 = vpop.f32.mrb[0].mxu0
  %v359 = vadd.f32 0.0, %v358
  %v360 = vpop.f32.mrb[0].mxu0
  %361 = vmatprep.mubr.f32.mxu0 0.0
  %362 = vmatmul.mubr.f32.gmra.mrb[0].mxu0 %v264
  %v363 = vpop.f32.mrb[0].mxu0
  %v364 = vadd.f32 0.0, %v363
  %v365 = vpop.f32.mrb[0].mxu0
  %366 = vdwg.mxu0
  %v367 = vadd.f32 %v243, %v349
  %v368 = vadd.f32 %v248, %v354
  %v369 = vadd.f32 %v253, %v359
  %v370 = vadd.f32 %v258, %v364
  %v371 = vld [vmem:[%s3] sm:$0x1]
  %v372 = vld [vmem:[%s3 + $0x1] sm:$0x1]
  %v373 = vadd.f32 %v367, %v368
  %v374 = vadd.f32 %v373, %v369
  %v375 = vadd.f32 %v374, %v370
  %v376 = vrot.slane %v375, 4
  %v377 = vadd.f32 %v375, %v376
  %v378 = vrot.slane %v377, 2
  %v379 = vadd.f32 %v377, %v378
  %v380 = vrot.slane %v379, 1
  %v381 = vadd.f32 %v379, %v380
  %382 = vmatprep.subr.mxu0 0.0
  %383 = vmatpush1.msra.mxu0 %v20
  %384 = vmatprep.subr.mxu0 0.0
  %385 = vmatpush1.msra.mxu0 %v21
  %386 = vmatprep.subr.mxu0 0.0
  %387 = vmatpush1.msra.mxu0 %v22
  %388 = vmatprep.subr.mxu0 0.0
  %389 = vmatpush1.msra.mxu0 %v23
  %390 = vmatprep.subr.mxu0 0.0
  %391 = vmatpush1.msra.mxu0 %v24
  %392 = vmatprep.subr.mxu0 0.0
  %393 = vmatpush1.msra.mxu0 %v25
  %394 = vmatprep.subr.mxu0 0.0
  %395 = vmatpush1.msra.mxu0 %v26
  %396 = vmatprep.subr.mxu0 0.0
  %397 = vmatpush1.msra.mxu0 %v27
  %398 = vmatprep.subr.mxu0 0.0
  %399 = vmatpush1.msra.mxu0 %v28
  %400 = vmatprep.subr.mxu0 0.0
  %401 = vmatpush1.msra.mxu0 %v29
  %402 = vmatprep.subr.mxu0 0.0
  %403 = vmatpush1.msra.mxu0 %v30
  %404 = vmatprep.subr.mxu0 0.0
  %405 = vmatpush1.msra.mxu0 %v31
  %406 = vmatprep.subr.mxu0 0.0
  %407 = vmatpush1.msra.mxu0 %v32
  %408 = vmatprep.subr.mxu0 0.0
  %409 = vmatpush1.msra.mxu0 %v33
  %410 = vmatprep.subr.mxu0 0.0
  %411 = vmatpush1.msra.mxu0 %v34
  %412 = vmatprep.subr.mxu0 0.0
  %413 = vmatpush1.msra.mxu0 %v35
  %414 = vmatprep.subr.mxu0 0.0
  %415 = vmatpush1.msra.mxu0 0.0
  %416 = vmatprep.subr.mxu0 0.0
  %417 = vmatpush1.msra.mxu0 0.0
  %418 = vmatprep.subr.mxu0 0.0
  %419 = vmatpush1.msra.mxu0 0.0
  %420 = vmatprep.subr.mxu0 0.0
  %421 = vmatpush1.msra.mxu0 0.0
  %422 = vmatprep.subr.mxu0 0.0
  %423 = vmatpush1.msra.mxu0 0.0
  %424 = vmatprep.subr.mxu0 0.0
  %425 = vmatpush1.msra.mxu0 0.0
  %426 = vmatprep.subr.mxu0 0.0
  %427 = vmatpush1.msra.mxu0 0.0
  %428 = vmatprep.subr.mxu0 0.0
  %429 = vmatpush1.msra.mxu0 0.0
  %430 = vmatprep.subr.mxu0 0.0
  %431 = vmatpush1.msra.mxu0 0.0
  %432 = vmatprep.subr.mxu0 0.0
  %433 = vmatpush1.msra.mxu0 0.0
  %434 = vmatprep.subr.mxu0 0.0
  %435 = vmatpush1.msra.mxu0 0.0
  %436 = vmatprep.subr.mxu0 0.0
  %437 = vmatpush1.msra.mxu0 0.0
  %438 = vmatprep.subr.mxu0 0.0
  %439 = vmatpush1.msra.mxu0 0.0
  %440 = vmatprep.subr.mxu0 0.0
  %441 = vmatpush1.msra.mxu0 0.0
  %442 = vmatprep.subr.mxu0 0.0
  %443 = vmatpush1.msra.mxu0 0.0
  %444 = vmatprep.subr.mxu0 0.0
  %445 = vmatpush1.msra.mxu0 0.0
  %446 = vmatprep.mubr.f32.mxu0 0.0
  %447 = vmatmul.mubr.f32.gmra.mrb[0].mxu0 %v381
  %v448 = vpop.f32.mrb[0].mxu0
  %v449 = vadd.f32 0.0, %v448
  %v450 = vpop.f32.mrb[0].mxu0
  %451 = vdwg.mxu0
  %v452 = vmul.f32 %v449, 0.001953125
  %v453 = vlaneseq
  %v454 = vshrl.u32 %v453, 7
  %v455 = vsub.s32 0, %v454
  %v456 = vrot.slane %v452, %v455
  %v457 = vsub.f32 %v367, %v456
  %v458 = vsub.f32 %v368, %v456
  %v459 = vsub.f32 %v369, %v456
  %v460 = vsub.f32 %v370, %v456
  %v461 = vmul.f32 %v457, %v457
  %v462 = vmul.f32 %v458, %v458
  %v463 = vmul.f32 %v459, %v459
  %v464 = vmul.f32 %v460, %v460
  %v465 = vadd.f32 %v461, %v462
  %v466 = vadd.f32 %v465, %v463
  %v467 = vadd.f32 %v466, %v464
  %v468 = vrot.slane %v467, 4
  %v469 = vadd.f32 %v467, %v468
  %v470 = vrot.slane %v469, 2
  %v471 = vadd.f32 %v469, %v470
  %v472 = vrot.slane %v471, 1
  %v473 = vadd.f32 %v471, %v472
  %474 = vmatprep.subr.mxu0 0.0
  %475 = vmatpush1.msra.mxu0 %v20
  %476 = vmatprep.subr.mxu0 0.0
  %477 = vmatpush1.msra.mxu0 %v21
  %478 = vmatprep.subr.mxu0 0.0
  %479 = vmatpush1.msra.mxu0 %v22
  %480 = vmatprep.subr.mxu0 0.0
  %481 = vmatpush1.msra.mxu0 %v23
  %482 = vmatprep.subr.mxu0 0.0
  %483 = vmatpush1.msra.mxu0 %v24
  %484 = vmatprep.subr.mxu0 0.0
  %485 = vmatpush1.msra.mxu0 %v25
  %486 = vmatprep.subr.mxu0 0.0
  %487 = vmatpush1.msra.mxu0 %v26
  %488 = vmatprep.subr.mxu0 0.0
  %489 = vmatpush1.msra.mxu0 %v27
  %490 = vmatprep.subr.mxu0 0.0
  %491 = vmatpush1.msra.mxu0 %v28
  %492 = vmatprep.subr.mxu0 0.0
  %493 = vmatpush1.msra.mxu0 %v29
  %494 = vmatprep.subr.mxu0 0.0
  %495 = vmatpush1.msra.mxu0 %v30
  %496 = vmatprep.subr.mxu0 0.0
  %497 = vmatpush1.msra.mxu0 %v31
  %498 = vmatprep.subr.mxu0 0.0
  %499 = vmatpush1.msra.mxu0 %v32
  %500 = vmatprep.subr.mxu0 0.0
  %501 = vmatpush1.msra.mxu0 %v33
  %502 = vmatprep.subr.mxu0 0.0
  %503 = vmatpush1.msra.mxu0 %v34
  %504 = vmatprep.subr.mxu0 0.0
  %505 = vmatpush1.msra.mxu0 %v35
  %506 = vmatprep.subr.mxu0 0.0
  %507 = vmatpush1.msra.mxu0 0.0
  %508 = vmatprep.subr.mxu0 0.0
  %509 = vmatpush1.msra.mxu0 0.0
  %510 = vmatprep.subr.mxu0 0.0
  %511 = vmatpush1.msra.mxu0 0.0
  %512 = vmatprep.subr.mxu0 0.0
  %513 = vmatpush1.msra.mxu0 0.0
  %514 = vmatprep.subr.mxu0 0.0
  %515 = vmatpush1.msra.mxu0 0.0
  %516 = vmatprep.subr.mxu0 0.0
  %517 = vmatpush1.msra.mxu0 0.0
  %518 = vmatprep.subr.mxu0 0.0
  %519 = vmatpush1.msra.mxu0 0.0
  %520 = vmatprep.subr.mxu0 0.0
  %521 = vmatpush1.msra.mxu0 0.0
  %522 = vmatprep.subr.mxu0 0.0
  %523 = vmatpush1.msra.mxu0 0.0
  %524 = vmatprep.subr.mxu0 0.0
  %525 = vmatpush1.msra.mxu0 0.0
  %526 = vmatprep.subr.mxu0 0.0
  %527 = vmatpush1.msra.mxu0 0.0
  %528 = vmatprep.subr.mxu0 0.0
  %529 = vmatpush1.msra.mxu0 0.0
  %530 = vmatprep.subr.mxu0 0.0
  %531 = vmatpush1.msra.mxu0 0.0
  %532 = vmatprep.subr.mxu0 0.0
  %533 = vmatpush1.msra.mxu0 0.0
  %534 = vmatprep.subr.mxu0 0.0
  %535 = vmatpush1.msra.mxu0 0.0
  %536 = vmatprep.subr.mxu0 0.0
  %537 = vmatpush1.msra.mxu0 0.0
  %538 = vmatprep.mubr.f32.mxu0 0.0
  %539 = vmatmul.mubr.f32.gmra.mrb[0].mxu0 %v473
  %v540 = vpop.f32.mrb[0].mxu0
  %v541 = vadd.f32 0.0, %v540
  %v542 = vpop.f32.mrb[0].mxu0
  %543 = vdwg.mxu0
  %v544 = vmul.f32 %v541, 0.001953125
  %v545 = vadd.f32 %v544, 1e-05
  %v546 = vrsqrt.pop %v545
  %v547 = vmul.f32 %v371, %v546
  %v548 = vlaneseq
  %v549 = vshrl.u32 %v548, 7
  %v550 = vsub.s32 0, %v549
  %v551 = vrot.slane %v547, %v550
  %v552 = vmul.f32 %v457, %v551
  %v553 = vmul.f32 %v458, %v551
  %v554 = vmul.f32 %v459, %v551
  %v555 = vmul.f32 %v460, %v551
  %v556 = vlaneseq
  %v557 = vshrl.u32 %v556, 7
  %v558 = vsub.s32 0, %v557
  %v559 = vrot.slane %v372, %v558
  %v560 = vadd.f32 %v552, %v559
  %v561 = vadd.f32 %v553, %v559
  %v562 = vadd.f32 %v554, %v559
  %v563 = vadd.f32 %v555, %v559
  %v564 = vmax.f32 %v560, 0.0
  %v565 = vmax.f32 %v561, 0.0
  %v566 = vmax.f32 %v562, 0.0
  %v567 = vmax.f32 %v563, 0.0
  %568 = vst [vmem:[#allocation2 + $0x1] sm:$0xff] %v564
  %569 = vst [vmem:[#allocation2 + $0x9] sm:$0xff] %v565
  %570 = vst [vmem:[#allocation2 + $0x19] sm:$0xff] %v566
  %571 = vst [vmem:[#allocation2 + $0x21] sm:$0xff] %v567
  %v572 = vld [vmem:[#allocation2] sm:$0xff]
  %v573 = vld [vmem:[#allocation2 + $0x8] sm:$0xff]
  %v574 = vld [vmem:[#allocation2 + $0x18] sm:$0xff]
  %v575 = vld [vmem:[#allocation2 + $0x20] sm:$0xff]
  %v576 = vld [vmem:[%s2] sm:$0xff]
  %v577 = vld [vmem:[%s2 + $0x8] sm:$0xff]
  %v578 = vld [vmem:[%s2 + $0x10] sm:$0xff]
  %v579 = vld [vmem:[%s2 + $0x18] sm:$0xff]
  %v580 = vld [vmem:[%s2 + $0x20] sm:$0xff]
  %v581 = vld [vmem:[%s2 + $0x28] sm:$0xff]
  %v582 = vld [vmem:[%s2 + $0x30] sm:$0xff]
  %v583 = vld [vmem:[%s2 + $0x38] sm:$0xff]
  %v584 = vld [vmem:[%s2 + $0x40] sm:$0xff]
  %v585 = vld [vmem:[%s2 + $0x48] sm:$0xff]
  %v586 = vld [vmem:[%s2 + $0x50] sm:$0xff]
  %v587 = vld [vmem:[%s2 + $0x58] sm:$0xff]
  %v588 = vld [vmem:[%s2 + $0x60] sm:$0xff]
  %v589 = vld [vmem:[%s2 + $0x68] sm:$0xff]
  %v590 = vld [vmem:[%s2 + $0x70] sm:$0xff]
  %v591 = vld [vmem:[%s2 + $0x78] sm:$0xff]
  %v592 = vld [vmem:[#allocation2 + $0x1] sm:$0xff]
  %v593 = vld [vmem:[#allocation2 + $0x9] sm:$0xff]
  %v594 = vld [vmem:[#allocation2 + $0x19] sm:$0xff]
  %v595 = vld [vmem:[#allocation2 + $0x21] sm:$0xff]
  %s596 = scalar_lea.vmem %s2, 128
  %v597 = vld [vmem:[%s596] sm:$0xff]
  %v598 = vld [vmem:[%s596 + $0x8] sm:$0xff]
  %v599 = vld [vmem:[%s596 + $0x10] sm:$0xff]
  %v600 = vld [vmem:[%s596 + $0x18] sm:$0xff]
  %v601 = vld [vmem:[%s596 + $0x20] sm:$0xff]
  %v602 = vld [vmem:[%s596 + $0x28] sm:$0xff]
  %v603 = vld [vmem:[%s596 + $0x30] sm:$0xff]
  %v604 = vld [vmem:[%s596 + $0x38] sm:$0xff]
  %v605 = vld [vmem:[%s596 + $0x40] sm:$0xff]
  %v606 = vld [vmem:[%s596 + $0x48] sm:$0xff]
  %v607 = vld [vmem:[%s596 + $0x50] sm:$0xff]
  %v608 = vld [vmem:[%s596 + $0x58] sm:$0xff]
  %v609 = vld [vmem:[%s596 + $0x60] sm:$0xff]
  %v610 = vld [vmem:[%s596 + $0x68] sm:$0xff]
  %v611 = vld [vmem:[%s596 + $0x70] sm:$0xff]
  %v612 = vld [vmem:[%s596 + $0x78] sm:$0xff]
  %613 = vmatprep.subr.mxu0 0.0
  %614 = vmatpush1.msra.mxu0 %v597
  %615 = vmatprep.subr.mxu0 0.0
  %616 = vmatpush1.msra.mxu0 %v598
  %617 = vmatprep.subr.mxu0 0.0
  %618 = vmatpush1.msra.mxu0 %v599
  %619 = vmatprep.subr.mxu0 0.0
  %620 = vmatpush1.msra.mxu0 %v600
  %621 = vmatprep.subr.mxu0 0.0
  %622 = vmatpush1.msra.mxu0 %v601
  %623 = vmatprep.subr.mxu0 0.0
  %624 = vmatpush1.msra.mxu0 %v602
  %625 = vmatprep.subr.mxu0 0.0
  %626 = vmatpush1.msra.mxu0 %v603
  %627 = vmatprep.subr.mxu0 0.0
  %628 = vmatpush1.msra.mxu0 %v604
  %629 = vmatprep.subr.mxu0 0.0
  %630 = vmatpush1.msra.mxu0 %v605
  %631 = vmatprep.subr.mxu0 0.0
  %632 = vmatpush1.msra.mxu0 %v606
  %633 = vmatprep.subr.mxu0 0.0
  %634 = vmatpush1.msra.mxu0 %v607
  %635 = vmatprep.subr.mxu0 0.0
  %636 = vmatpush1.msra.mxu0 %v608
  %637 = vmatprep.subr.mxu0 0.0
  %638 = vmatpush1.msra.mxu0 %v609
  %639 = vmatprep.subr.mxu0 0.0
  %640 = vmatpush1.msra.mxu0 %v610
  %641 = vmatprep.subr.mxu0 0.0
  %642 = vmatpush1.msra.mxu0 %v611
  %643 = vmatprep.subr.mxu0 0.0
  %644 = vmatpush1.msra.mxu0 %v612
  %645 = vmatprep.subr.mxu0 0.0
  %646 = vmatpush1.msra.mxu0 0.0
  %647 = vmatprep.subr.mxu0 0.0
  %648 = vmatpush1.msra.mxu0 0.0
  %649 = vmatprep.subr.mxu0 0.0
  %650 = vmatpush1.msra.mxu0 0.0
  %651 = vmatprep.subr.mxu0 0.0
  %652 = vmatpush1.msra.mxu0 0.0
  %653 = vmatprep.subr.mxu0 0.0
  %654 = vmatpush1.msra.mxu0 0.0
  %655 = vmatprep.subr.mxu0 0.0
  %656 = vmatpush1.msra.mxu0 0.0
  %657 = vmatprep.subr.mxu0 0.0
  %658 = vmatpush1.msra.mxu0 0.0
  %659 = vmatprep.subr.mxu0 0.0
  %660 = vmatpush1.msra.mxu0 0.0
  %661 = vmatprep.subr.mxu0 0.0
  %662 = vmatpush1.msra.mxu0 0.0
  %663 = vmatprep.subr.mxu0 0.0
  %664 = vmatpush1.msra.mxu0 0.0
  %665 = vmatprep.subr.mxu0 0.0
  %666 = vmatpush1.msra.mxu0 0.0
  %667 = vmatprep.subr.mxu0 0.0
  %668 = vmatpush1.msra.mxu0 0.0
  %669 = vmatprep.subr.mxu0 0.0
  %670 = vmatpush1.msra.mxu0 0.0
  %671 = vmatprep.subr.mxu0 0.0
  %672 = vmatpush1.msra.mxu0 0.0
  %673 = vmatprep.subr.mxu0 0.0
  %674 = vmatpush1.msra.mxu0 0.0
  %675 = vmatprep.subr.mxu0 0.0
  %676 = vmatpush1.msra.mxu0 0.0
  %677 = vmatprep.mubr.f32.mxu0 0.0
  %678 = vmatmul.mubr.f32.gmra.mrb[0].mxu0 %v592
  %v679 = vpop.f32.mrb[0].mxu0
  %v680 = vadd.f32 0.0, %v679
  %v681 = vpop.f32.mrb[0].mxu0
  %682 = vmatprep.mubr.f32.mxu0 0.0
  %683 = vmatmul.mubr.f32.gmra.mrb[0].mxu0 %v593
  %v684 = vpop.f32.mrb[0].mxu0
  %v685 = vadd.f32 0.0, %v684
  %v686 = vpop.f32.mrb[0].mxu0
  %687 = vmatprep.mubr.f32.mxu0 0.0
  %688 = vmatmul.mubr.f32.gmra.mrb[0].mxu0 %v594
  %v689 = vpop.f32.mrb[0].mxu0
  %v690 = vadd.f32 0.0, %v689
  %v691 = vpop.f32.mrb[0].mxu0
  %692 = vmatprep.mubr.f32.mxu0 0.0
  %693 = vmatmul.mubr.f32.gmra.mrb[0].mxu0 %v595
  %v694 = vpop.f32.mrb[0].mxu0
  %v695 = vadd.f32 0.0, %v694
  %v696 = vpop.f32.mrb[0].mxu0
  %697 = vdwg.mxu0
  %698 = vmatprep.subr.mxu0 0.0
  %699 = vmatpush1.msra.mxu0 %v576
  %700 = vmatprep.subr.mxu0 0.0
  %701 = vmatpush1.msra.mxu0 %v577
  %702 = vmatprep.subr.mxu0 0.0
  %703 = vmatpush1.msra.mxu0 %v578
  %704 = vmatprep.subr.mxu0 0.0
  %705 = vmatpush1.msra.mxu0 %v579
  %706 = vmatprep.subr.mxu0 0.0
  %707 = vmatpush1.msra.mxu0 %v580
  %708 = vmatprep.subr.mxu0 0.0
  %709 = vmatpush1.msra.mxu0 %v581
  %710 = vmatprep.subr.mxu0 0.0
  %711 = vmatpush1.msra.mxu0 %v582
  %712 = vmatprep.subr.mxu0 0.0
  %713 = vmatpush1.msra.mxu0 %v583
  %714 = vmatprep.subr.mxu0 0.0
  %715 = vmatpush1.msra.mxu0 %v584
  %716 = vmatprep.subr.mxu0 0.0
  %717 = vmatpush1.msra.mxu0 %v585
  %718 = vmatprep.subr.mxu0 0.0
  %719 = vmatpush1.msra.mxu0 %v586
  %720 = vmatprep.subr.mxu0 0.0
  %721 = vmatpush1.msra.mxu0 %v587
  %722 = vmatprep.subr.mxu0 0.0
  %723 = vmatpush1.msra.mxu0 %v588
  %724 = vmatprep.subr.mxu0 0.0
  %725 = vmatpush1.msra.mxu0 %v589
  %726 = vmatprep.subr.mxu0 0.0
  %727 = vmatpush1.msra.mxu0 %v590
  %728 = vmatprep.subr.mxu0 0.0
  %729 = vmatpush1.msra.mxu0 %v591
  %730 = vmatprep.subr.mxu0 0.0
  %731 = vmatpush1.msra.mxu0 0.0
  %732 = vmatprep.subr.mxu0 0.0
  %733 = vmatpush1.msra.mxu0 0.0
  %734 = vmatprep.subr.mxu0 0.0
  %735 = vmatpush1.msra.mxu0 0.0
  %736 = vmatprep.subr.mxu0 0.0
  %737 = vmatpush1.msra.mxu0 0.0
  %738 = vmatprep.subr.mxu0 0.0
  %739 = vmatpush1.msra.mxu0 0.0
  %740 = vmatprep.subr.mxu0 0.0
  %741 = vmatpush1.msra.mxu0 0.0
  %742 = vmatprep.subr.mxu0 0.0
  %743 = vmatpush1.msra.mxu0 0.0
  %744 = vmatprep.subr.mxu0 0.0
  %745 = vmatpush1.msra.mxu0 0.0
  %746 = vmatprep.subr.mxu0 0.0
  %747 = vmatpush1.msra.mxu0 0.0
  %748 = vmatprep.subr.mxu0 0.0
  %749 = vmatpush1.msra.mxu0 0.0
  %750 = vmatprep.subr.mxu0 0.0
  %751 = vmatpush1.msra.mxu0 0.0
  %752 = vmatprep.subr.mxu0 0.0
  %753 = vmatpush1.msra.mxu0 0.0
  %754 = vmatprep.subr.mxu0 0.0
  %755 = vmatpush1.msra.mxu0 0.0
  %756 = vmatprep.subr.mxu0 0.0
  %757 = vmatpush1.msra.mxu0 0.0
  %758 = vmatprep.subr.mxu0 0.0
  %759 = vmatpush1.msra.mxu0 0.0
  %760 = vmatprep.subr.mxu0 0.0
  %761 = vmatpush1.msra.mxu0 0.0
  %762 = vmatprep.mubr.f32.mxu0 0.0
  %763 = vmatmul.mubr.f32.gmra.mrb[0].mxu0 %v572
  %v764 = vpop.f32.mrb[0].mxu0
  %v765 = vadd.f32 %v680, %v764
  %v766 = vpop.f32.mrb[0].mxu0
  %767 = vmatprep.mubr.f32.mxu0 0.0
  %768 = vmatmul.mubr.f32.gmra.mrb[0].mxu0 %v573
  %v769 = vpop.f32.mrb[0].mxu0
  %v770 = vadd.f32 %v685, %v769
  %v771 = vpop.f32.mrb[0].mxu0
  %772 = vmatprep.mubr.f32.mxu0 0.0
  %773 = vmatmul.mubr.f32.gmra.mrb[0].mxu0 %v574
  %v774 = vpop.f32.mrb[0].mxu0
  %v775 = vadd.f32 %v690, %v774
  %v776 = vpop.f32.mrb[0].mxu0
  %777 = vmatprep.mubr.f32.mxu0 0.0
  %778 = vmatmul.mubr.f32.gmra.mrb[0].mxu0 %v575
  %v779 = vpop.f32.mrb[0].mxu0
  %v780 = vadd.f32 %v695, %v779
  %v781 = vpop.f32.mrb[0].mxu0
  %782 = vdwg.mxu0
  %v783 = vld [vmem:[#allocation2 + $0x2] sm:$0xff]
  %v784 = vld [vmem:[#allocation2 + $0xa] sm:$0xff]
  %v785 = vld [vmem:[#allocation2 + $0x1a] sm:$0xff]
  %v786 = vld [vmem:[#allocation2 + $0x22] sm:$0xff]
  %s787 = scalar_lea.vmem %s2, 256
  %v788 = vld [vmem:[%s787] sm:$0xff]
  %v789 = vld [vmem:[%s787 + $0x8] sm:$0xff]
  %v790 = vld [vmem:[%s787 + $0x10] sm:$0xff]
  %v791 = vld [vmem:[%s787 + $0x18] sm:$0xff]
  %v792 = vld [vmem:[%s787 + $0x20] sm:$0xff]
  %v793 = vld [vmem:[%s787 + $0x28] sm:$0xff]
  %v794 = vld [vmem:[%s787 + $0x30] sm:$0xff]
  %v795 = vld [vmem:[%s787 + $0x38] sm:$0xff]
  %v796 = vld [vmem:[%s787 + $0x40] sm:$0xff]
  %v797 = vld [vmem:[%s787 + $0x48] sm:$0xff]
  %v798 = vld [vmem:[%s787 + $0x50] sm:$0xff]
  %v799 = vld [vmem:[%s787 + $0x58] sm:$0xff]
  %v800 = vld [vmem:[%s787 + $0x60] sm:$0xff]
  %v801 = vld [vmem:[%s787 + $0x68] sm:$0xff]
  %v802 = vld [vmem:[%s787 + $0x70] sm:$0xff]
  %v803 = vld [vmem:[%s787 + $0x78] sm:$0xff]
  %804 = vmatprep.subr.mxu0 0.0
  %805 = vmatpush1.msra.mxu0 %v788
  %806 = vmatprep.subr.mxu0 0.0
  %807 = vmatpush1.msra.mxu0 %v789
  %808 = vmatprep.subr.mxu0 0.0
  %809 = vmatpush1.msra.mxu0 %v790
  %810 = vmatprep.subr.mxu0 0.0
  %811 = vmatpush1.msra.mxu0 %v791
  %812 = vmatprep.subr.mxu0 0.0
  %813 = vmatpush1.msra.mxu0 %v792
  %814 = vmatprep.subr.mxu0 0.0
  %815 = vmatpush1.msra.mxu0 %v793
  %816 = vmatprep.subr.mxu0 0.0
  %817 = vmatpush1.msra.mxu0 %v794
  %818 = vmatprep.subr.mxu0 0.0
  %819 = vmatpush1.msra.mxu0 %v795
  %820 = vmatprep.subr.mxu0 0.0
  %821 = vmatpush1.msra.mxu0 %v796
  %822 = vmatprep.subr.mxu0 0.0
  %823 = vmatpush1.msra.mxu0 %v797
  %824 = vmatprep.subr.mxu0 0.0
  %825 = vmatpush1.msra.mxu0 %v798
  %826 = vmatprep.subr.mxu0 0.0
  %827 = vmatpush1.msra.mxu0 %v799
  %828 = vmatprep.subr.mxu0 0.0
  %829 = vmatpush1.msra.mxu0 %v800
  %830 = vmatprep.subr.mxu0 0.0
  %831 = vmatpush1.msra.mxu0 %v801
  %832 = vmatprep.subr.mxu0 0.0
  %833 = vmatpush1.msra.mxu0 %v802
  %834 = vmatprep.subr.mxu0 0.0
  %835 = vmatpush1.msra.mxu0 %v803
  %836 = vmatprep.subr.mxu0 0.0
  %837 = vmatpush1.msra.mxu0 0.0
  %838 = vmatprep.subr.mxu0 0.0
  %839 = vmatpush1.msra.mxu0 0.0
  %840 = vmatprep.subr.mxu0 0.0
  %841 = vmatpush1.msra.mxu0 0.0
  %842 = vmatprep.subr.mxu0 0.0
  %843 = vmatpush1.msra.mxu0 0.0
  %844 = vmatprep.subr.mxu0 0.0
  %845 = vmatpush1.msra.mxu0 0.0
  %846 = vmatprep.subr.mxu0 0.0
  %847 = vmatpush1.msra.mxu0 0.0
  %848 = vmatprep.subr.mxu0 0.0
  %849 = vmatpush1.msra.mxu0 0.0
  %850 = vmatprep.subr.mxu0 0.0
  %851 = vmatpush1.msra.mxu0 0.0
  %852 = vmatprep.subr.mxu0 0.0
  %853 = vmatpush1.msra.mxu0 0.0
  %854 = vmatprep.subr.mxu0 0.0
  %855 = vmatpush1.msra.mxu0 0.0
  %856 = vmatprep.subr.mxu0 0.0
  %857 = vmatpush1.msra.mxu0 0.0
  %858 = vmatprep.subr.mxu0 0.0
  %859 = vmatpush1.msra.mxu0 0.0
  %860 = vmatprep.subr.mxu0 0.0
  %861 = vmatpush1.msra.mxu0 0.0
  %862 = vmatprep.subr.mxu0 0.0
  %863 = vmatpush1.msra.mxu0 0.0
  %864 = vmatprep.subr.mxu0 0.0
  %865 = vmatpush1.msra.mxu0 0.0
  %866 = vmatprep.subr.mxu0 0.0
  %867 = vmatpush1.msra.mxu0 0.0
  %868 = vmatprep.mubr.f32.mxu0 0.0
  %869 = vmatmul.mubr.f32.gmra.mrb[0].mxu0 %v783
  %v870 = vpop.f32.mrb[0].mxu0
  %v871 = vadd.f32 0.0, %v870
  %v872 = vpop.f32.mrb[0].mxu0
  %873 = vmatprep.mubr.f32.mxu0 0.0
  %874 = vmatmul.mubr.f32.gmra.mrb[0].mxu0 %v784
  %v875 = vpop.f32.mrb[0].mxu0
  %v876 = vadd.f32 0.0, %v875
  %v877 = vpop.f32.mrb[0].mxu0
  %878 = vmatprep.mubr.f32.mxu0 0.0
  %879 = vmatmul.mubr.f32.gmra.mrb[0].mxu0 %v785
  %v880 = vpop.f32.mrb[0].mxu0
  %v881 = vadd.f32 0.0, %v880
  %v882 = vpop.f32.mrb[0].mxu0
  %883 = vmatprep.mubr.f32.mxu0 0.0
  %884 = vmatmul.mubr.f32.gmra.mrb[0].mxu0 %v786
  %v885 = vpop.f32.mrb[0].mxu0
  %v886 = vadd.f32 0.0, %v885
  %v887 = vpop.f32.mrb[0].mxu0
  %888 = vdwg.mxu0
  %v889 = vadd.f32 %v765, %v871
  %v890 = vadd.f32 %v770, %v876
  %v891 = vadd.f32 %v775, %v881
  %v892 = vadd.f32 %v780, %v886
  %v893 = vld [vmem:[%s3 + $0x2] sm:$0x1]
  %v894 = vld [vmem:[%s3 + $0x3] sm:$0x1]
  %v895 = vld [vmem:[%s0] sm:$0xff]
  %v896 = vld [vmem:[%s0 + $0x8] sm:$0xff]
  %v897 = vld [vmem:[%s0 + $0x10] sm:$0xff]
  %v898 = vld [vmem:[%s0 + $0x18] sm:$0xff]
  %v899 = vadd.f32 %v889, %v890
  %v900 = vadd.f32 %v899, %v891
  %v901 = vadd.f32 %v900, %v892
  %v902 = vrot.slane %v901, 4
  %v903 = vadd.f32 %v901, %v902
  %v904 = vrot.slane %v903, 2
  %v905 = vadd.f32 %v903, %v904
  %v906 = vrot.slane %v905, 1
  %v907 = vadd.f32 %v905, %v906
  %908 = vmatprep.subr.mxu0 0.0
  %909 = vmatpush1.msra.mxu0 %v20
  %910 = vmatprep.subr.mxu0 0.0
  %911 = vmatpush1.msra.mxu0 %v21
  %912 = vmatprep.subr.mxu0 0.0
  %913 = vmatpush1.msra.mxu0 %v22
  %914 = vmatprep.subr.mxu0 0.0
  %915 = vmatpush1.msra.mxu0 %v23
  %916 = vmatprep.subr.mxu0 0.0
  %917 = vmatpush1.msra.mxu0 %v24
  %918 = vmatprep.subr.mxu0 0.0
  %919 = vmatpush1.msra.mxu0 %v25
  %920 = vmatprep.subr.mxu0 0.0
  %921 = vmatpush1.msra.mxu0 %v26
  %922 = vmatprep.subr.mxu0 0.0
  %923 = vmatpush1.msra.mxu0 %v27
  %924 = vmatprep.subr.mxu0 0.0
  %925 = vmatpush1.msra.mxu0 %v28
  %926 = vmatprep.subr.mxu0 0.0
  %927 = vmatpush1.msra.mxu0 %v29
  %928 = vmatprep.subr.mxu0 0.0
  %929 = vmatpush1.msra.mxu0 %v30
  %930 = vmatprep.subr.mxu0 0.0
  %931 = vmatpush1.msra.mxu0 %v31
  %932 = vmatprep.subr.mxu0 0.0
  %933 = vmatpush1.msra.mxu0 %v32
  %934 = vmatprep.subr.mxu0 0.0
  %935 = vmatpush1.msra.mxu0 %v33
  %936 = vmatprep.subr.mxu0 0.0
  %937 = vmatpush1.msra.mxu0 %v34
  %938 = vmatprep.subr.mxu0 0.0
  %939 = vmatpush1.msra.mxu0 %v35
  %940 = vmatprep.subr.mxu0 0.0
  %941 = vmatpush1.msra.mxu0 0.0
  %942 = vmatprep.subr.mxu0 0.0
  %943 = vmatpush1.msra.mxu0 0.0
  %944 = vmatprep.subr.mxu0 0.0
  %945 = vmatpush1.msra.mxu0 0.0
  %946 = vmatprep.subr.mxu0 0.0
  %947 = vmatpush1.msra.mxu0 0.0
  %948 = vmatprep.subr.mxu0 0.0
  %949 = vmatpush1.msra.mxu0 0.0
  %950 = vmatprep.subr.mxu0 0.0
  %951 = vmatpush1.msra.mxu0 0.0
  %952 = vmatprep.subr.mxu0 0.0
  %953 = vmatpush1.msra.mxu0 0.0
  %954 = vmatprep.subr.mxu0 0.0
  %955 = vmatpush1.msra.mxu0 0.0
  %956 = vmatprep.subr.mxu0 0.0
  %957 = vmatpush1.msra.mxu0 0.0
  %958 = vmatprep.subr.mxu0 0.0
  %959 = vmatpush1.msra.mxu0 0.0
  %960 = vmatprep.subr.mxu0 0.0
  %961 = vmatpush1.msra.mxu0 0.0
  %962 = vmatprep.subr.mxu0 0.0
  %963 = vmatpush1.msra.mxu0 0.0
  %964 = vmatprep.subr.mxu0 0.0
  %965 = vmatpush1.msra.mxu0 0.0
  %966 = vmatprep.subr.mxu0 0.0
  %967 = vmatpush1.msra.mxu0 0.0
  %968 = vmatprep.subr.mxu0 0.0
  %969 = vmatpush1.msra.mxu0 0.0
  %970 = vmatprep.subr.mxu0 0.0
  %971 = vmatpush1.msra.mxu0 0.0
  %972 = vmatprep.mubr.f32.mxu0 0.0
  %973 = vmatmul.mubr.f32.gmra.mrb[0].mxu0 %v907
  %v974 = vpop.f32.mrb[0].mxu0
  %v975 = vadd.f32 0.0, %v974
  %v976 = vpop.f32.mrb[0].mxu0
  %977 = vdwg.mxu0
  %v978 = vmul.f32 %v975, 0.001953125
  %v979 = vlaneseq
  %v980 = vshrl.u32 %v979, 7
  %v981 = vsub.s32 0, %v980
  %v982 = vrot.slane %v978, %v981
  %v983 = vsub.f32 %v889, %v982
  %v984 = vsub.f32 %v890, %v982
  %v985 = vsub.f32 %v891, %v982
  %v986 = vsub.f32 %v892, %v982
  %v987 = vmul.f32 %v983, %v983
  %v988 = vmul.f32 %v984, %v984
  %v989 = vmul.f32 %v985, %v985
  %v990 = vmul.f32 %v986, %v986
  %v991 = vadd.f32 %v987, %v988
  %v992 = vadd.f32 %v991, %v989
  %v993 = vadd.f32 %v992, %v990
  %v994 = vrot.slane %v993, 4
  %v995 = vadd.f32 %v993, %v994
  %v996 = vrot.slane %v995, 2
  %v997 = vadd.f32 %v995, %v996
  %v998 = vrot.slane %v997, 1
  %v999 = vadd.f32 %v997, %v998
  %1000 = vmatprep.subr.mxu0 0.0
  %1001 = vmatpush1.msra.mxu0 %v20
  %1002 = vmatprep.subr.mxu0 0.0
  %1003 = vmatpush1.msra.mxu0 %v21
  %1004 = vmatprep.subr.mxu0 0.0
  %1005 = vmatpush1.msra.mxu0 %v22
  %1006 = vmatprep.subr.mxu0 0.0
  %1007 = vmatpush1.msra.mxu0 %v23
  %1008 = vmatprep.subr.mxu0 0.0
  %1009 = vmatpush1.msra.mxu0 %v24
  %1010 = vmatprep.subr.mxu0 0.0
  %1011 = vmatpush1.msra.mxu0 %v25
  %1012 = vmatprep.subr.mxu0 0.0
  %1013 = vmatpush1.msra.mxu0 %v26
  %1014 = vmatprep.subr.mxu0 0.0
  %1015 = vmatpush1.msra.mxu0 %v27
  %1016 = vmatprep.subr.mxu0 0.0
  %1017 = vmatpush1.msra.mxu0 %v28
  %1018 = vmatprep.subr.mxu0 0.0
  %1019 = vmatpush1.msra.mxu0 %v29
  %1020 = vmatprep.subr.mxu0 0.0
  %1021 = vmatpush1.msra.mxu0 %v30
  %1022 = vmatprep.subr.mxu0 0.0
  %1023 = vmatpush1.msra.mxu0 %v31
  %1024 = vmatprep.subr.mxu0 0.0
  %1025 = vmatpush1.msra.mxu0 %v32
  %1026 = vmatprep.subr.mxu0 0.0
  %1027 = vmatpush1.msra.mxu0 %v33
  %1028 = vmatprep.subr.mxu0 0.0
  %1029 = vmatpush1.msra.mxu0 %v34
  %1030 = vmatprep.subr.mxu0 0.0
  %1031 = vmatpush1.msra.mxu0 %v35
  %1032 = vmatprep.subr.mxu0 0.0
  %1033 = vmatpush1.msra.mxu0 0.0
  %1034 = vmatprep.subr.mxu0 0.0
  %1035 = vmatpush1.msra.mxu0 0.0
  %1036 = vmatprep.subr.mxu0 0.0
  %1037 = vmatpush1.msra.mxu0 0.0
  %1038 = vmatprep.subr.mxu0 0.0
  %1039 = vmatpush1.msra.mxu0 0.0
  %1040 = vmatprep.subr.mxu0 0.0
  %1041 = vmatpush1.msra.mxu0 0.0
  %1042 = vmatprep.subr.mxu0 0.0
  %1043 = vmatpush1.msra.mxu0 0.0
  %1044 = vmatprep.subr.mxu0 0.0
  %1045 = vmatpush1.msra.mxu0 0.0
  %1046 = vmatprep.subr.mxu0 0.0
  %1047 = vmatpush1.msra.mxu0 0.0
  %1048 = vmatprep.subr.mxu0 0.0
  %1049 = vmatpush1.msra.mxu0 0.0
  %1050 = vmatprep.subr.mxu0 0.0
  %1051 = vmatpush1.msra.mxu0 0.0
  %1052 = vmatprep.subr.mxu0 0.0
  %1053 = vmatpush1.msra.mxu0 0.0
  %1054 = vmatprep.subr.mxu0 0.0
  %1055 = vmatpush1.msra.mxu0 0.0
  %1056 = vmatprep.subr.mxu0 0.0
  %1057 = vmatpush1.msra.mxu0 0.0
  %1058 = vmatprep.subr.mxu0 0.0
  %1059 = vmatpush1.msra.mxu0 0.0
  %1060 = vmatprep.subr.mxu0 0.0
  %1061 = vmatpush1.msra.mxu0 0.0
  %1062 = vmatprep.subr.mxu0 0.0
  %1063 = vmatpush1.msra.mxu0 0.0
  %1064 = vmatprep.mubr.f32.mxu0 0.0
  %1065 = vmatmul.mubr.f32.gmra.mrb[0].mxu0 %v999
  %v1066 = vpop.f32.mrb[0].mxu0
  %v1067 = vadd.f32 0.0, %v1066
  %v1068 = vpop.f32.mrb[0].mxu0
  %1069 = vdwg.mxu0
  %v1070 = vmul.f32 %v1067, 0.001953125
  %v1071 = vadd.f32 %v1070, 1e-05
  %v1072 = vrsqrt.pop %v1071
  %v1073 = vmul.f32 %v893, %v1072
  %v1074 = vlaneseq
  %v1075 = vshrl.u32 %v1074, 7
  %v1076 = vsub.s32 0, %v1075
  %v1077 = vrot.slane %v1073, %v1076
  %v1078 = vmul.f32 %v983, %v1077
  %v1079 = vmul.f32 %v984, %v1077
  %v1080 = vmul.f32 %v985, %v1077
  %v1081 = vmul.f32 %v986, %v1077
  %v1082 = vlaneseq
  %v1083 = vshrl.u32 %v1082, 7
  %v1084 = vsub.s32 0, %v1083
  %v1085 = vrot.slane %v894, %v1084
  %v1086 = vadd.f32 %v1078, %v1085
  %v1087 = vadd.f32 %v1079, %v1085
  %v1088 = vadd.f32 %v1080, %v1085
  %v1089 = vadd.f32 %v1081, %v1085
  %v1090 = vadd.f32 %v1086, %v895
  %v1091 = vadd.f32 %v1087, %v896
  %v1092 = vadd.f32 %v1088, %v897
  %v1093 = vadd.f32 %v1089, %v898
  %v1094 = vmax.f32 %v1090, 0.0
  %v1095 = vmax.f32 %v1091, 0.0
  %v1096 = vmax.f32 %v1092, 0.0
  %v1097 = vmax.f32 %v1093, 0.0
  %1098 = vst [vmem:[%s5] sm:$0xff] %v1094
  %1099 = vst [vmem:[%s5 + $0x8] sm:$0xff] %v1095
  %1100 = vst [vmem:[%s5 + $0x10] sm:$0xff] %v1096
  %1101 = vst [vmem:[%s5 + $0x18] sm:$0xff] %v1097
  // Predicated region
  $region22: #{basic_block1.1} parent=0 // pred_check
    _
  $region23: #{basic_block1.1} parent=0 // pred_check_branch
    %1103 = sbr.rel (0) target = $region25
  $region24: #{basic_block1.1} parent=0 // pred_region
    _
  $region25: #{basic_block1.1} parent=0 // pred_fallthru
    _
  // Predicated region
  $region26: #{basic_block1.1} parent=0 // pred_check
    _
  $region27: #{basic_block1.1} parent=0 // pred_check_branch
    %1105 = sbr.rel (0) target = $region29
  $region28: #{basic_block1.1} parent=0 // pred_region
    _
  $region29: #{basic_block1.1} parent=0 // pred_fallthru
    _

</llo_original>
